<compile_context>
chip_gen: v7x
topology: tpu7x:2x2x1
jax: 0.10.0
libtpu: 0.0.40
codegen_flags: <defaults>
</compile_context>

<pallas_src>
import functools

import numpy as np
import jax
import jax.numpy as jnp
from jax import lax
from jax.experimental import pallas as pl
from jax.experimental.pallas import tpu as pltpu


def _round_up(x, m):
    return (x + m - 1) // m * m


# --------------------------------------------------------------------------- #
# Fused Linear + ReLU + Linear + ReLU
# --------------------------------------------------------------------------- #
def _mlp_kernel(x_ref, w1_ref, b1_ref, w2_ref, b2_ref, o_ref):
    # x:(N,Dp) w1:(Dp,128) b1:(1,128) w2:(128,H2p) b2:(1,H2p) o:(N,H2p)
    h1 = jnp.dot(x_ref[...], w1_ref[...], preferred_element_type=jnp.float32)
    h1 = jnp.maximum(h1 + b1_ref[...], 0.0)
    h2 = jnp.dot(h1, w2_ref[...], preferred_element_type=jnp.float32)
    o_ref[...] = jnp.maximum(h2 + b2_ref[...], 0.0).astype(o_ref.dtype)


def mlp_forward(x, w1, b1, w2, b2):
    """Torch layouts: w (out, in), b (out,)."""
    N, D = x.shape
    H1 = w1.shape[0]                       # 128
    H2 = w2.shape[0]                       # 288
    D_pad = max(_round_up(D, 8), 8)        # pad tiny contraction dim (4 -> 8)
    H2_pad = _round_up(H2, 128)            # lane-dense output (288 -> 384)

    xp = jnp.pad(x, ((0, 0), (0, D_pad - D)))
    w1t = jnp.pad(w1.T, ((0, D_pad - D), (0, 0)))          # (D_pad, H1)
    w2t = jnp.pad(w2.T, ((0, 0), (0, H2_pad - H2)))        # (H1, H2_pad)
    b1r = b1.reshape(1, H1)
    b2r = jnp.pad(b2, (0, H2_pad - H2)).reshape(1, H2_pad)

    out = pl.pallas_call(
        _mlp_kernel,
        out_shape=jax.ShapeDtypeStruct((N, H2_pad), x.dtype),
        grid=(1,),
        in_specs=[
            pl.BlockSpec((N, D_pad), lambda i: (0, 0)),
            pl.BlockSpec((D_pad, H1), lambda i: (0, 0)),
            pl.BlockSpec((1, H1), lambda i: (0, 0)),
            pl.BlockSpec((H1, H2_pad), lambda i: (0, 0)),
            pl.BlockSpec((1, H2_pad), lambda i: (0, 0)),
        ],
        out_specs=pl.BlockSpec((N, H2_pad), lambda i: (0, 0)),
        compiler_params=pltpu.CompilerParams(dimension_semantics=("arbitrary",)),
    )(xp, w1t, b1r, w2t, b2r)
    return out[:, :H2]


# --------------------------------------------------------------------------- #
# ConvTranspose2d (+ folded eval-mode BN + ReLU) as one im2col matmul kernel
# --------------------------------------------------------------------------- #
def _deconv_kernel(x_ref, w_ref, b_ref, o_ref, *, taps, slice_len, apply_relu):
    # x_ref: (1, C_in, P_pad)   flattened dilated+padded plane, one batch element
    # w_ref: (C_out_p, K*K*C_in)  BN-folded direct-conv weight, rows = (tap, c_in)
    # b_ref: (C_out_p, 1)
    # o_ref: (1, C_out_p, L_pad)  flat output in W_pad-row-stride layout
    x = x_ref[0]                                          # (C_in, P_pad)
    cols = [x[:, off:off + slice_len] for off in taps]    # K*K shifted lane-slices
    col = jnp.concatenate(cols, axis=0)                   # (K*K*C_in, L_pad)
    acc = jnp.dot(w_ref[...], col, preferred_element_type=jnp.float32)
    acc = acc + b_ref[...]
    if apply_relu:
        acc = jnp.maximum(acc, 0.0)
    o_ref[0] = acc.astype(o_ref.dtype)


def conv_transpose2d(x, wt, bias, *, stride, padding, output_padding,
                     bn=None, relu=False):
    """PyTorch ConvTranspose2d semantics.

    x:    (N, C_in, H, W)
    wt:   (C_in, C_out, K, K)    torch ConvTranspose2d weight layout
    bias: (C_out,)
    bn:   optional (gamma, beta, running_mean, running_var, eps)  [eval mode]
    """
    N, C_in, H_in, W_in = x.shape
    C_out, K = wt.shape[1], wt.shape[2]

    H_out = (H_in - 1) * stride - 2 * padding + K + output_padding
    W_out = (W_in - 1) * stride - 2 * padding + K + output_padding

    # conv_transpose == VALID conv over the zero-dilated, zero-padded input.
    pad_lo = K - 1 - padding
    pad_hi = K - 1 - padding + output_padding
    H_pad = (H_in - 1) * stride + 1 + pad_lo + pad_hi
    W_pad = (W_in - 1) * stride + 1 + pad_lo + pad_hi

    # XLA glue (tiny tensors): dilate + pad, flatten spatial rows into lanes.
    zero = jnp.zeros((), x.dtype)
    xd = lax.pad(x, zero, ((0, 0, 0), (0, 0, 0),
                           (pad_lo, pad_hi, stride - 1),
                           (pad_lo, pad_hi, stride - 1)))
    xflat = xd.reshape(N, C_in, H_pad * W_pad)

    # Weight: convtranspose -> direct conv (swap in/out channels, flip taps),
    # fold BN scale/shift, reorder rows to match the (tap, c_in) column order.
    w_conv = jnp.flip(wt, axis=(2, 3)).transpose(1, 0, 2, 3)    # (C_out,C_in,K,K)
    b_eff = bias
    if bn is not None:
        gamma, beta, mean, var, eps = bn
        scale = gamma / jnp.sqrt(var + eps)
        w_conv = w_conv * scale[:, None, None, None]
        b_eff = (bias - mean) * scale + beta
    w_mat = w_conv.transpose(0, 2, 3, 1).reshape(C_out, K * K * C_in)

    # Lane-dense / sublane-friendly padded sizes.
    kkc = K * K * C_in
    L_pad = _round_up(H_out * W_pad, 128)          # output lanes, multiple of 128
    taps = tuple(ki * W_pad + kj for ki in range(K) for kj in range(K))
    P_pad = _round_up(max(H_pad * W_pad, taps[-1] + L_pad), 128)
    C_out_p = _round_up(C_out, 8)                  # pad channels to sublane mult

    xflat = jnp.pad(xflat, ((0, 0), (0, 0), (0, P_pad - H_pad * W_pad)))
    w_mat = jnp.pad(w_mat, ((0, C_out_p - C_out), (0, 0)))
    b_col = jnp.pad(b_eff, (0, C_out_p - C_out)).reshape(C_out_p, 1)

    kernel = functools.partial(_deconv_kernel, taps=taps, slice_len=L_pad,
                               apply_relu=relu)
    cost = pl.CostEstimate(
        flops=2 * N * C_out_p * kkc * L_pad,
        transcendentals=0,
        bytes_accessed=4 * (N * C_in * P_pad + C_out_p * kkc + C_out_p
                            + N * C_out_p * L_pad),
    )

    out_flat = pl.pallas_call(
        kernel,
        out_shape=jax.ShapeDtypeStruct((N, C_out_p, L_pad), x.dtype),
        grid=(N,),
        in_specs=[
            pl.BlockSpec((1, C_in, P_pad), lambda n: (n, 0, 0)),
            pl.BlockSpec((C_out_p, kkc), lambda n: (0, 0)),
            pl.BlockSpec((C_out_p, 1), lambda n: (0, 0)),
        ],
        out_specs=pl.BlockSpec((1, C_out_p, L_pad), lambda n: (n, 0, 0)),
        compiler_params=pltpu.CompilerParams(dimension_semantics=("parallel",)),
        cost_estimate=cost,
    )(xflat, w_mat, b_col)

    # Flat output rows are W_pad-strided; crop to (H_out, W_out) and real C_out.
    out = out_flat[:, :C_out, :H_out * W_pad].reshape(N, C_out, H_out, W_pad)
    return out[:, :, :, :W_out]


# --------------------------------------------------------------------------- #
# Full DecMNIST forward
# --------------------------------------------------------------------------- #
def dec_mnist_forward(x, p):
    h = mlp_forward(x, p["lin1_w"], p["lin1_b"], p["lin2_w"], p["lin2_b"])
    h = h.reshape(x.shape[0], 32, 3, 3)                       # Unflatten
    h = conv_transpose2d(h, p["ct1_w"], p["ct1_b"], stride=2, padding=0,
                         output_padding=0,
                         bn=(p["bn1_g"], p["bn1_b"], p["bn1_m"], p["bn1_v"], 1e-5),
                         relu=True)
    h = conv_transpose2d(h, p["ct2_w"], p["ct2_b"], stride=2, padding=1,
                         output_padding=1,
                         bn=(p["bn2_g"], p["bn2_b"], p["bn2_m"], p["bn2_v"], 1e-5),
                         relu=True)
    h = conv_transpose2d(h, p["ct3_w"], p["ct3_b"], stride=2, padding=1,
                         output_padding=1, bn=None, relu=False)
    return h


# --------------------------------------------------------------------------- #
# Pure-numpy reference (independent of the kernel-side weight transforms)
# --------------------------------------------------------------------------- #
def _np_conv_transpose2d(x, w, b, stride, padding, output_padding):
    N, C_in, H, W = x.shape
    C_out, K = w.shape[1], w.shape[2]
    H_out = (H - 1) * stride - 2 * padding + K + output_padding
    W_out = (W - 1) * stride - 2 * padding + K + output_padding
    big = np.zeros((N, C_out, (H - 1) * stride + K + output_padding,
                    (W - 1) * stride + K + output_padding), np.float64)
    for i in range(H):
        for j in range(W):
            big[:, :, i * stride:i * stride + K, j * stride:j * stride + K] += \
                np.einsum("nc,cokl->nokl", x[:, :, i, j], w)
    y = big[:, :, padding:padding + H_out, padding:padding + W_out]
    return y + b.reshape(1, C_out, 1, 1)


def _np_bn(x, gamma, beta, mean, var, eps=1e-5):
    return (x - mean.reshape(1, -1, 1, 1)) / np.sqrt(var.reshape(1, -1, 1, 1) + eps) \
        * gamma.reshape(1, -1, 1, 1) + beta.reshape(1, -1, 1, 1)


def _np_reference(x, p):
    f = {k: np.asarray(v, np.float64) for k, v in p.items()}
    x = np.asarray(x, np.float64)
    h = np.maximum(x @ f["lin1_w"].T + f["lin1_b"], 0.0)
    h = np.maximum(h @ f["lin2_w"].T + f["lin2_b"], 0.0)
    h = h.reshape(x.shape[0], 32, 3, 3)
    h = _np_conv_transpose2d(h, f["ct1_w"], f["ct1_b"], 2, 0, 0)
    h = np.maximum(_np_bn(h, f["bn1_g"], f["bn1_b"], f["bn1_m"], f["bn1_v"]), 0.0)
    h = _np_conv_transpose2d(h, f["ct2_w"], f["ct2_b"], 2, 1, 1)
    h = np.maximum(_np_bn(h, f["bn2_g"], f["bn2_b"], f["bn2_m"], f["bn2_v"]), 0.0)
    h = _np_conv_transpose2d(h, f["ct3_w"], f["ct3_b"], 2, 1, 1)
    return h


if __name__ == "__main__":
    N, D = 2, 4                                      # encoded_space_dim = 4
    key = jax.random.PRNGKey(0)
    ks = jax.random.split(key, 20)
    r = lambda k, s, sc=0.2: sc * jax.random.normal(k, s, dtype=jnp.float32)

    params = {
        "lin1_w": r(ks[0], (128, D), 0.3),
        "lin1_b": r(ks[1], (128,), 0.1),
        "lin2_w": r(ks[2], (288, 128), 0.1),
        "lin2_b": r(ks[3], (288,), 0.1),
        "ct1_w": r(ks[4], (32, 16, 3, 3), 0.15),
        "ct1_b": r(ks[5], (16,), 0.1),
        "bn1_g": 1.0 + r(ks[6], (16,), 0.1),
        "bn1_b": r(ks[7], (16,), 0.1),
        "bn1_m": r(ks[8], (16,), 0.1),
        "bn1_v": 0.5 + jax.random.uniform(ks[9], (16,), dtype=jnp.float32),
        "ct2_w": r(ks[10], (16, 8, 3, 3), 0.2),
        "ct2_b": r(ks[11], (8,), 0.1),
        "bn2_g": 1.0 + r(ks[12], (8,), 0.1),
        "bn2_b": r(ks[13], (8,), 0.1),
        "bn2_m": r(ks[14], (8,), 0.1),
        "bn2_v": 0.5 + jax.random.uniform(ks[15], (8,), dtype=jnp.float32),
        "ct3_w": r(ks[16], (8, 1, 3, 3), 0.3),
        "ct3_b": r(ks[17], (1,), 0.1),
    }
    x = r(ks[18], (N, D), 1.0)

    out = jax.jit(dec_mnist_forward)(x, params)
    out = jax.block_until_ready(out)

    assert out.shape == (N, 1, 28, 28), out.shape
    ref = _np_reference(np.asarray(x), params)
    np.testing.assert_allclose(np.asarray(out, np.float64), ref,
                               atol=1e-2, rtol=1e-2)
    print("KERNEL_OK")
</pallas_src>

<mosaic_0001>
module attributes {stable_mosaic.version = 11 : i64} {
  func.func @_mlp_kernel(%arg0: i32, %arg1: memref<2x8xf32, #tpu.memory_space<vmem>>, %arg2: memref<8x128xf32, #tpu.memory_space<vmem>>, %arg3: memref<1x128xf32, #tpu.memory_space<vmem>>, %arg4: memref<128x384xf32, #tpu.memory_space<vmem>>, %arg5: memref<1x384xf32, #tpu.memory_space<vmem>>, %arg6: memref<2x384xf32, #tpu.memory_space<vmem>>) attributes {dimension_semantics = [#tpu.dimension_semantics<arbitrary>], iteration_bounds = array<i64: 1>, scalar_prefetch = 0 : i64, scratch_operands = 0 : i64, tpu.core_type = #tpu.core_type<tc>, window_params = [{pipeline_mode = #tpu.pipeline_mode<synchronous>, transform_indices = @transform_0, window_bounds = array<i64: 2, 8>}, {pipeline_mode = #tpu.pipeline_mode<synchronous>, transform_indices = @transform_1, window_bounds = array<i64: 8, 128>}, {pipeline_mode = #tpu.pipeline_mode<synchronous>, transform_indices = @transform_2, window_bounds = array<i64: 1, 128>}, {pipeline_mode = #tpu.pipeline_mode<synchronous>, transform_indices = @transform_3, window_bounds = array<i64: 128, 384>}, {pipeline_mode = #tpu.pipeline_mode<synchronous>, transform_indices = @transform_4, window_bounds = array<i64: 1, 384>}, {pipeline_mode = #tpu.pipeline_mode<synchronous>, transform_indices = @transform_5, window_bounds = array<i64: 2, 384>}]} {
    %c0 = arith.constant 0 : index
    %c0_0 = arith.constant 0 : index
    %0 = vector.load %arg1[%c0, %c0_0] : memref<2x8xf32, #tpu.memory_space<vmem>>, vector<2x8xf32>
    %c0_1 = arith.constant 0 : index
    %c0_2 = arith.constant 0 : index
    %1 = vector.load %arg2[%c0_1, %c0_2] : memref<8x128xf32, #tpu.memory_space<vmem>>, vector<8x128xf32>
    %cst = arith.constant dense<0.000000e+00> : vector<2x128xf32>
    %2 = tpu.matmul %0, %1, %cst {dimension_numbers = #tpu.dot_dimension_numbers<[1], [0], [0], [1], [0, 0, 1, 1], [], []>} : vector<2x8xf32>, vector<8x128xf32>, vector<2x128xf32> -> vector<2x128xf32>
    %c0_3 = arith.constant 0 : index
    %c0_4 = arith.constant 0 : index
    %3 = vector.load %arg3[%c0_3, %c0_4] : memref<1x128xf32, #tpu.memory_space<vmem>>, vector<1x128xf32>
    %4 = vector.broadcast %3 : vector<1x128xf32> to vector<2x128xf32>
    %5 = arith.addf %2, %4 : vector<2x128xf32>
    %cst_5 = arith.constant 0.000000e+00 : f32
    %6 = vector.broadcast %cst_5 : f32 to vector<2x128xf32>
    %7 = arith.maximumf %5, %6 : vector<2x128xf32>
    %c0_6 = arith.constant 0 : index
    %c0_7 = arith.constant 0 : index
    %8 = vector.load %arg4[%c0_6, %c0_7] : memref<128x384xf32, #tpu.memory_space<vmem>>, vector<128x384xf32>
    %cst_8 = arith.constant dense<0.000000e+00> : vector<2x384xf32>
    %9 = tpu.matmul %7, %8, %cst_8 {dimension_numbers = #tpu.dot_dimension_numbers<[1], [0], [0], [1], [0, 0, 1, 1], [], []>} : vector<2x128xf32>, vector<128x384xf32>, vector<2x384xf32> -> vector<2x384xf32>
    %c0_9 = arith.constant 0 : index
    %c0_10 = arith.constant 0 : index
    %10 = vector.load %arg5[%c0_9, %c0_10] : memref<1x384xf32, #tpu.memory_space<vmem>>, vector<1x384xf32>
    %11 = vector.broadcast %10 : vector<1x384xf32> to vector<2x384xf32>
    %12 = arith.addf %9, %11 : vector<2x384xf32>
    %cst_11 = arith.constant 0.000000e+00 : f32
    %13 = vector.broadcast %cst_11 : f32 to vector<2x384xf32>
    %14 = arith.maximumf %12, %13 : vector<2x384xf32>
    %c0_12 = arith.constant 0 : index
    %c0_13 = arith.constant 0 : index
    %15 = vector.load %arg6[%c0_12, %c0_13] : memref<2x384xf32, #tpu.memory_space<vmem>>, vector<2x384xf32>
    tpu.vector_store %arg6[%c0_12, %c0_13], %14 {strides = array<i32>} : memref<2x384xf32, #tpu.memory_space<vmem>>, vector<2x384xf32>,
    return
  }
  func.func @transform_0(%arg0: i32) -> (i32, i32) {
    %c0_i32 = arith.constant 0 : i32
    %c0_i32_0 = arith.constant 0 : i32
    %c0_i32_1 = arith.constant 0 : i32
    return %c0_i32, %c0_i32_0 : i32, i32
  }
  func.func @transform_1(%arg0: i32) -> (i32, i32) {
    %c0_i32 = arith.constant 0 : i32
    %c0_i32_0 = arith.constant 0 : i32
    %c0_i32_1 = arith.constant 0 : i32
    return %c0_i32, %c0_i32_0 : i32, i32
  }
  func.func @transform_2(%arg0: i32) -> (i32, i32) {
    %c0_i32 = arith.constant 0 : i32
    %c0_i32_0 = arith.constant 0 : i32
    %c0_i32_1 = arith.constant 0 : i32
    return %c0_i32, %c0_i32_0 : i32, i32
  }
  func.func @transform_3(%arg0: i32) -> (i32, i32) {
    %c0_i32 = arith.constant 0 : i32
    %c0_i32_0 = arith.constant 0 : i32
    %c0_i32_1 = arith.constant 0 : i32
    return %c0_i32, %c0_i32_0 : i32, i32
  }
  func.func @transform_4(%arg0: i32) -> (i32, i32) {
    %c0_i32 = arith.constant 0 : i32
    %c0_i32_0 = arith.constant 0 : i32
    %c0_i32_1 = arith.constant 0 : i32
    return %c0_i32, %c0_i32_0 : i32, i32
  }
  func.func @transform_5(%arg0: i32) -> (i32, i32) {
    %c0_i32 = arith.constant 0 : i32
    %c0_i32_0 = arith.constant 0 : i32
    %c0_i32_1 = arith.constant 0 : i32
    return %c0_i32, %c0_i32_0 : i32, i32
  }
}

module attributes {stable_mosaic.version = 11 : i64} {
  func.func @_deconv_kernel(%arg0: i32, %arg1: memref<1x32x256xf32, #tpu.memory_space<vmem>>, %arg2: memref<16x288xf32, #tpu.memory_space<vmem>>, %arg3: memref<16x1xf32, #tpu.memory_space<vmem>>, %arg4: memref<1x16x128xf32, #tpu.memory_space<vmem>>) attributes {dimension_semantics = [#tpu.dimension_semantics<parallel>], iteration_bounds = array<i64: 2>, scalar_prefetch = 0 : i64, scratch_operands = 0 : i64, tpu.core_type = #tpu.core_type<tc>, window_params = [{transform_indices = @transform_0, window_bounds = array<i64: 1, 32, 256>}, {pipeline_mode = #tpu.pipeline_mode<synchronous>, transform_indices = @transform_1, window_bounds = array<i64: 16, 288>}, {pipeline_mode = #tpu.pipeline_mode<synchronous>, transform_indices = @transform_2, window_bounds = array<i64: 16, 1>}, {transform_indices = @transform_3, window_bounds = array<i64: 1, 16, 128>}]} {
    %c0 = arith.constant 0 : index
    %c0_0 = arith.constant 0 : index
    %c0_1 = arith.constant 0 : index
    %0 = vector.load %arg1[%c0, %c0_0, %c0_1] : memref<1x32x256xf32, #tpu.memory_space<vmem>>, vector<1x32x256xf32>
    %1 = vector.shape_cast %0 : vector<1x32x256xf32> to vector<32x256xf32>
    %2 = vector.extract_strided_slice %1 {offsets = [0, 0], sizes = [32, 128], strides = [1, 1]} : vector<32x256xf32> to vector<32x128xf32>
    %3 = vector.extract_strided_slice %1 {offsets = [0, 1], sizes = [32, 128], strides = [1, 1]} : vector<32x256xf32> to vector<32x128xf32>
    %4 = vector.extract_strided_slice %1 {offsets = [0, 2], sizes = [32, 128], strides = [1, 1]} : vector<32x256xf32> to vector<32x128xf32>
    %5 = vector.extract_strided_slice %1 {offsets = [0, 9], sizes = [32, 128], strides = [1, 1]} : vector<32x256xf32> to vector<32x128xf32>
    %6 = vector.extract_strided_slice %1 {offsets = [0, 10], sizes = [32, 128], strides = [1, 1]} : vector<32x256xf32> to vector<32x128xf32>
    %7 = vector.extract_strided_slice %1 {offsets = [0, 11], sizes = [32, 128], strides = [1, 1]} : vector<32x256xf32> to vector<32x128xf32>
    %8 = vector.extract_strided_slice %1 {offsets = [0, 18], sizes = [32, 128], strides = [1, 1]} : vector<32x256xf32> to vector<32x128xf32>
    %9 = vector.extract_strided_slice %1 {offsets = [0, 19], sizes = [32, 128], strides = [1, 1]} : vector<32x256xf32> to vector<32x128xf32>
    %10 = vector.extract_strided_slice %1 {offsets = [0, 20], sizes = [32, 128], strides = [1, 1]} : vector<32x256xf32> to vector<32x128xf32>
    %11 = tpu.concatenate %2, %3, %4, %5, %6, %7, %8, %9, %10 in 0 : vector<32x128xf32>, vector<32x128xf32>, vector<32x128xf32>, vector<32x128xf32>, vector<32x128xf32>, vector<32x128xf32>, vector<32x128xf32>, vector<32x128xf32>, vector<32x128xf32> -> vector<288x128xf32>
    %c0_2 = arith.constant 0 : index
    %c0_3 = arith.constant 0 : index
    %12 = vector.load %arg2[%c0_2, %c0_3] : memref<16x288xf32, #tpu.memory_space<vmem>>, vector<16x288xf32>
    %cst = arith.constant dense<0.000000e+00> : vector<16x128xf32>
    %13 = tpu.matmul %12, %11, %cst {dimension_numbers = #tpu.dot_dimension_numbers<[1], [0], [0], [1], [0, 0, 1, 1], [], []>} : vector<16x288xf32>, vector<288x128xf32>, vector<16x128xf32> -> vector<16x128xf32>
    %c0_4 = arith.constant 0 : index
    %c0_5 = arith.constant 0 : index
    %14 = vector.load %arg3[%c0_4, %c0_5] : memref<16x1xf32, #tpu.memory_space<vmem>>, vector<16x1xf32>
    %15 = vector.broadcast %14 : vector<16x1xf32> to vector<16x128xf32>
    %16 = arith.addf %13, %15 : vector<16x128xf32>
    %cst_6 = arith.constant 0.000000e+00 : f32
    %17 = vector.broadcast %cst_6 : f32 to vector<16x128xf32>
    %18 = arith.maximumf %16, %17 : vector<16x128xf32>
    %c0_7 = arith.constant 0 : index
    %c0_8 = arith.constant 0 : index
    %c0_9 = arith.constant 0 : index
    %19 = vector.load %arg4[%c0_7, %c0_8, %c0_9] : memref<1x16x128xf32, #tpu.memory_space<vmem>>, vector<1x16x128xf32>
    %20 = vector.shape_cast %19 : vector<1x16x128xf32> to vector<16x128xf32>
    %21 = vector.shape_cast %18 : vector<16x128xf32> to vector<1x16x128xf32>
    tpu.vector_store %arg4[%c0_7, %c0_8, %c0_9], %21 {strides = array<i32>} : memref<1x16x128xf32, #tpu.memory_space<vmem>>, vector<1x16x128xf32>,
    return
  }
  func.func @transform_0(%arg0: i32) -> (i32, i32, i32) {
    %c0_i32 = arith.constant 0 : i32
    %c0_i32_0 = arith.constant 0 : i32
    %c0_i32_1 = arith.constant 0 : i32
    return %arg0, %c0_i32, %c0_i32_0 : i32, i32, i32
  }
  func.func @transform_1(%arg0: i32) -> (i32, i32) {
    %c0_i32 = arith.constant 0 : i32
    %c0_i32_0 = arith.constant 0 : i32
    %c0_i32_1 = arith.constant 0 : i32
    return %c0_i32, %c0_i32_0 : i32, i32
  }
  func.func @transform_2(%arg0: i32) -> (i32, i32) {
    %c0_i32 = arith.constant 0 : i32
    %c0_i32_0 = arith.constant 0 : i32
    %c0_i32_1 = arith.constant 0 : i32
    return %c0_i32, %c0_i32_0 : i32, i32
  }
  func.func @transform_3(%arg0: i32) -> (i32, i32, i32) {
    %c0_i32 = arith.constant 0 : i32
    %c0_i32_0 = arith.constant 0 : i32
    %c0_i32_1 = arith.constant 0 : i32
    return %arg0, %c0_i32, %c0_i32_0 : i32, i32, i32
  }
}

module attributes {stable_mosaic.version = 11 : i64} {
  func.func @_deconv_kernel(%arg0: i32, %arg1: memref<1x16x384xf32, #tpu.memory_space<vmem>>, %arg2: memref<8x144xf32, #tpu.memory_space<vmem>>, %arg3: memref<8x1xf32, #tpu.memory_space<vmem>>, %arg4: memref<1x8x256xf32, #tpu.memory_space<vmem>>) attributes {dimension_semantics = [#tpu.dimension_semantics<parallel>], iteration_bounds = array<i64: 2>, scalar_prefetch = 0 : i64, scratch_operands = 0 : i64, tpu.core_type = #tpu.core_type<tc>, window_params = [{transform_indices = @transform_0, window_bounds = array<i64: 1, 16, 384>}, {pipeline_mode = #tpu.pipeline_mode<synchronous>, transform_indices = @transform_1, window_bounds = array<i64: 8, 144>}, {pipeline_mode = #tpu.pipeline_mode<synchronous>, transform_indices = @transform_2, window_bounds = array<i64: 8, 1>}, {transform_indices = @transform_3, window_bounds = array<i64: 1, 8, 256>}]} {
    %c0 = arith.constant 0 : index
    %c0_0 = arith.constant 0 : index
    %c0_1 = arith.constant 0 : index
    %0 = vector.load %arg1[%c0, %c0_0, %c0_1] : memref<1x16x384xf32, #tpu.memory_space<vmem>>, vector<1x16x384xf32>
    %1 = vector.shape_cast %0 : vector<1x16x384xf32> to vector<16x384xf32>
    %2 = vector.extract_strided_slice %1 {offsets = [0, 0], sizes = [16, 256], strides = [1, 1]} : vector<16x384xf32> to vector<16x256xf32>
    %3 = vector.extract_strided_slice %1 {offsets = [0, 1], sizes = [16, 256], strides = [1, 1]} : vector<16x384xf32> to vector<16x256xf32>
    %4 = vector.extract_strided_slice %1 {offsets = [0, 2], sizes = [16, 256], strides = [1, 1]} : vector<16x384xf32> to vector<16x256xf32>
    %5 = vector.extract_strided_slice %1 {offsets = [0, 16], sizes = [16, 256], strides = [1, 1]} : vector<16x384xf32> to vector<16x256xf32>
    %6 = vector.extract_strided_slice %1 {offsets = [0, 17], sizes = [16, 256], strides = [1, 1]} : vector<16x384xf32> to vector<16x256xf32>
    %7 = vector.extract_strided_slice %1 {offsets = [0, 18], sizes = [16, 256], strides = [1, 1]} : vector<16x384xf32> to vector<16x256xf32>
    %8 = vector.extract_strided_slice %1 {offsets = [0, 32], sizes = [16, 256], strides = [1, 1]} : vector<16x384xf32> to vector<16x256xf32>
    %9 = vector.extract_strided_slice %1 {offsets = [0, 33], sizes = [16, 256], strides = [1, 1]} : vector<16x384xf32> to vector<16x256xf32>
    %10 = vector.extract_strided_slice %1 {offsets = [0, 34], sizes = [16, 256], strides = [1, 1]} : vector<16x384xf32> to vector<16x256xf32>
    %11 = tpu.concatenate %2, %3, %4, %5, %6, %7, %8, %9, %10 in 0 : vector<16x256xf32>, vector<16x256xf32>, vector<16x256xf32>, vector<16x256xf32>, vector<16x256xf32>, vector<16x256xf32>, vector<16x256xf32>, vector<16x256xf32>, vector<16x256xf32> -> vector<144x256xf32>
    %c0_2 = arith.constant 0 : index
    %c0_3 = arith.constant 0 : index
    %12 = vector.load %arg2[%c0_2, %c0_3] : memref<8x144xf32, #tpu.memory_space<vmem>>, vector<8x144xf32>
    %cst = arith.constant dense<0.000000e+00> : vector<8x256xf32>
    %13 = tpu.matmul %12, %11, %cst {dimension_numbers = #tpu.dot_dimension_numbers<[1], [0], [0], [1], [0, 0, 1, 1], [], []>} : vector<8x144xf32>, vector<144x256xf32>, vector<8x256xf32> -> vector<8x256xf32>
    %c0_4 = arith.constant 0 : index
    %c0_5 = arith.constant 0 : index
    %14 = vector.load %arg3[%c0_4, %c0_5] : memref<8x1xf32, #tpu.memory_space<vmem>>, vector<8x1xf32>
    %15 = vector.broadcast %14 : vector<8x1xf32> to vector<8x256xf32>
    %16 = arith.addf %13, %15 : vector<8x256xf32>
    %cst_6 = arith.constant 0.000000e+00 : f32
    %17 = vector.broadcast %cst_6 : f32 to vector<8x256xf32>
    %18 = arith.maximumf %16, %17 : vector<8x256xf32>
    %c0_7 = arith.constant 0 : index
    %c0_8 = arith.constant 0 : index
    %c0_9 = arith.constant 0 : index
    %19 = vector.load %arg4[%c0_7, %c0_8, %c0_9] : memref<1x8x256xf32, #tpu.memory_space<vmem>>, vector<1x8x256xf32>
    %20 = vector.shape_cast %19 : vector<1x8x256xf32> to vector<8x256xf32>
    %21 = vector.shape_cast %18 : vector<8x256xf32> to vector<1x8x256xf32>
    tpu.vector_store %arg4[%c0_7, %c0_8, %c0_9], %21 {strides = array<i32>} : memref<1x8x256xf32, #tpu.memory_space<vmem>>, vector<1x8x256xf32>,
    return
  }
  func.func @transform_0(%arg0: i32) -> (i32, i32, i32) {
    %c0_i32 = arith.constant 0 : i32
    %c0_i32_0 = arith.constant 0 : i32
    %c0_i32_1 = arith.constant 0 : i32
    return %arg0, %c0_i32, %c0_i32_0 : i32, i32, i32
  }
  func.func @transform_1(%arg0: i32) -> (i32, i32) {
    %c0_i32 = arith.constant 0 : i32
    %c0_i32_0 = arith.constant 0 : i32
    %c0_i32_1 = arith.constant 0 : i32
    return %c0_i32, %c0_i32_0 : i32, i32
  }
  func.func @transform_2(%arg0: i32) -> (i32, i32) {
    %c0_i32 = arith.constant 0 : i32
    %c0_i32_0 = arith.constant 0 : i32
    %c0_i32_1 = arith.constant 0 : i32
    return %c0_i32, %c0_i32_0 : i32, i32
  }
  func.func @transform_3(%arg0: i32) -> (i32, i32, i32) {
    %c0_i32 = arith.constant 0 : i32
    %c0_i32_0 = arith.constant 0 : i32
    %c0_i32_1 = arith.constant 0 : i32
    return %arg0, %c0_i32, %c0_i32_0 : i32, i32, i32
  }
}

module attributes {stable_mosaic.version = 11 : i64} {
  func.func @_deconv_kernel(%arg0: i32, %arg1: memref<1x8x1024xf32, #tpu.memory_space<vmem>>, %arg2: memref<8x72xf32, #tpu.memory_space<vmem>>, %arg3: memref<8x1xf32, #tpu.memory_space<vmem>>, %arg4: memref<1x8x896xf32, #tpu.memory_space<vmem>>) attributes {dimension_semantics = [#tpu.dimension_semantics<parallel>], iteration_bounds = array<i64: 2>, scalar_prefetch = 0 : i64, scratch_operands = 0 : i64, tpu.core_type = #tpu.core_type<tc>, window_params = [{transform_indices = @transform_0, window_bounds = array<i64: 1, 8, 1024>}, {pipeline_mode = #tpu.pipeline_mode<synchronous>, transform_indices = @transform_1, window_bounds = array<i64: 8, 72>}, {pipeline_mode = #tpu.pipeline_mode<synchronous>, transform_indices = @transform_2, window_bounds = array<i64: 8, 1>}, {transform_indices = @transform_3, window_bounds = array<i64: 1, 8, 896>}]} {
    %c0 = arith.constant 0 : index
    %c0_0 = arith.constant 0 : index
    %c0_1 = arith.constant 0 : index
    %0 = vector.load %arg1[%c0, %c0_0, %c0_1] : memref<1x8x1024xf32, #tpu.memory_space<vmem>>, vector<1x8x1024xf32>
    %1 = vector.shape_cast %0 : vector<1x8x1024xf32> to vector<8x1024xf32>
    %2 = vector.extract_strided_slice %1 {offsets = [0, 0], sizes = [8, 896], strides = [1, 1]} : vector<8x1024xf32> to vector<8x896xf32>
    %3 = vector.extract_strided_slice %1 {offsets = [0, 1], sizes = [8, 896], strides = [1, 1]} : vector<8x1024xf32> to vector<8x896xf32>
    %4 = vector.extract_strided_slice %1 {offsets = [0, 2], sizes = [8, 896], strides = [1, 1]} : vector<8x1024xf32> to vector<8x896xf32>
    %5 = vector.extract_strided_slice %1 {offsets = [0, 30], sizes = [8, 896], strides = [1, 1]} : vector<8x1024xf32> to vector<8x896xf32>
    %6 = vector.extract_strided_slice %1 {offsets = [0, 31], sizes = [8, 896], strides = [1, 1]} : vector<8x1024xf32> to vector<8x896xf32>
    %7 = vector.extract_strided_slice %1 {offsets = [0, 32], sizes = [8, 896], strides = [1, 1]} : vector<8x1024xf32> to vector<8x896xf32>
    %8 = vector.extract_strided_slice %1 {offsets = [0, 60], sizes = [8, 896], strides = [1, 1]} : vector<8x1024xf32> to vector<8x896xf32>
    %9 = vector.extract_strided_slice %1 {offsets = [0, 61], sizes = [8, 896], strides = [1, 1]} : vector<8x1024xf32> to vector<8x896xf32>
    %10 = vector.extract_strided_slice %1 {offsets = [0, 62], sizes = [8, 896], strides = [1, 1]} : vector<8x1024xf32> to vector<8x896xf32>
    %11 = tpu.concatenate %2, %3, %4, %5, %6, %7, %8, %9, %10 in 0 : vector<8x896xf32>, vector<8x896xf32>, vector<8x896xf32>, vector<8x896xf32>, vector<8x896xf32>, vector<8x896xf32>, vector<8x896xf32>, vector<8x896xf32>, vector<8x896xf32> -> vector<72x896xf32>
    %c0_2 = arith.constant 0 : index
    %c0_3 = arith.constant 0 : index
    %12 = vector.load %arg2[%c0_2, %c0_3] : memref<8x72xf32, #tpu.memory_space<vmem>>, vector<8x72xf32>
    %cst = arith.constant dense<0.000000e+00> : vector<8x896xf32>
    %13 = tpu.matmul %12, %11, %cst {dimension_numbers = #tpu.dot_dimension_numbers<[1], [0], [0], [1], [0, 0, 1, 1], [], []>} : vector<8x72xf32>, vector<72x896xf32>, vector<8x896xf32> -> vector<8x896xf32>
    %c0_4 = arith.constant 0 : index
    %c0_5 = arith.constant 0 : index
    %14 = vector.load %arg3[%c0_4, %c0_5] : memref<8x1xf32, #tpu.memory_space<vmem>>, vector<8x1xf32>
    %15 = vector.broadcast %14 : vector<8x1xf32> to vector<8x896xf32>
    %16 = arith.addf %13, %15 : vector<8x896xf32>
    %c0_6 = arith.constant 0 : index
    %c0_7 = arith.constant 0 : index
    %c0_8 = arith.constant 0 : index
    %17 = vector.load %arg4[%c0_6, %c0_7, %c0_8] : memref<1x8x896xf32, #tpu.memory_space<vmem>>, vector<1x8x896xf32>
    %18 = vector.shape_cast %17 : vector<1x8x896xf32> to vector<8x896xf32>
    %19 = vector.shape_cast %16 : vector<8x896xf32> to vector<1x8x896xf32>
    tpu.vector_store %arg4[%c0_6, %c0_7, %c0_8], %19 {strides = array<i32>} : memref<1x8x896xf32, #tpu.memory_space<vmem>>, vector<1x8x896xf32>,
    return
  }
  func.func @transform_0(%arg0: i32) -> (i32, i32, i32) {
    %c0_i32 = arith.constant 0 : i32
    %c0_i32_0 = arith.constant 0 : i32
    %c0_i32_1 = arith.constant 0 : i32
    return %arg0, %c0_i32, %c0_i32_0 : i32, i32, i32
  }
  func.func @transform_1(%arg0: i32) -> (i32, i32) {
    %c0_i32 = arith.constant 0 : i32
    %c0_i32_0 = arith.constant 0 : i32
    %c0_i32_1 = arith.constant 0 : i32
    return %c0_i32, %c0_i32_0 : i32, i32
  }
  func.func @transform_2(%arg0: i32) -> (i32, i32) {
    %c0_i32 = arith.constant 0 : i32
    %c0_i32_0 = arith.constant 0 : i32
    %c0_i32_1 = arith.constant 0 : i32
    return %c0_i32, %c0_i32_0 : i32, i32
  }
  func.func @transform_3(%arg0: i32) -> (i32, i32, i32) {
    %c0_i32 = arith.constant 0 : i32
    %c0_i32_0 = arith.constant 0 : i32
    %c0_i32_1 = arith.constant 0 : i32
    return %arg0, %c0_i32, %c0_i32_0 : i32, i32, i32
  }
}

</mosaic_0001>

<llo_original>
// kernel: dec_mnist_forward.4
$region0: #{dec_mnist_forward.4}
  #allocation0 [shape = 'u32[]', space=smem, size = 0x4, offset = 0x4, fixed_abs, tag = 'smem constant byte address 0x4 - core index']
  #allocation1 [shape = 'u32[144,128]{1,0:T(1,128)}', space=vmem, size = 0x12000, scoped, tag = 'internal scratch']
  %s0 = inlined_call_operand.vmem [shape: f32[2,8], index: 0, kind: input, shape index: {}]
  %s1 = inlined_call_operand.vmem [shape: f32[8,128], index: 1, kind: input, shape index: {}]
  %s2 = inlined_call_operand.vmem [shape: f32[1,128], index: 2, kind: input, shape index: {}]
  %s3 = inlined_call_operand.vmem [shape: f32[128,384], index: 3, kind: input, shape index: {}]
  %s4 = inlined_call_operand.vmem [shape: f32[1,384], index: 4, kind: input, shape index: {}]
  %s5 = inlined_call_operand.vmem [shape: f32[2,384], index: 5, kind: output, shape index: {}]
  %s6 = sld [smem:[#allocation0]]
  $region30: #{dec_mnist_forward.4} parent=0
    _
  %s8 = ssub.s32 1, %s6
  %s9 = scalar_select 0, %s8, %s6
  // Predicated region
  $region2: #{dec_mnist_forward.4} parent=0 // pred_check
    _
  $region3: #{dec_mnist_forward.4} parent=0 // pred_check_branch
    %11 = sbr.rel (0) target = $region5
  $region4: #{dec_mnist_forward.4} parent=0 // pred_region
    _
  $region5: #{dec_mnist_forward.4} parent=0 // pred_fallthru
    _
  // Predicated region
  $region6: #{dec_mnist_forward.4} parent=0 // pred_check
    _
  $region7: #{dec_mnist_forward.4} parent=0 // pred_check_branch
    %13 = sbr.rel (0) target = $region9
  $region8: #{dec_mnist_forward.4} parent=0 // pred_region
    _
  $region9: #{dec_mnist_forward.4} parent=0 // pred_fallthru
    _
  // Predicated region
  $region10: #{dec_mnist_forward.4} parent=0 // pred_check
    _
  $region11: #{dec_mnist_forward.4} parent=0 // pred_check_branch
    %15 = sbr.rel (0) target = $region13
  $region12: #{dec_mnist_forward.4} parent=0 // pred_region
    _
  $region13: #{dec_mnist_forward.4} parent=0 // pred_fallthru
    _
  // Predicated region
  $region14: #{dec_mnist_forward.4} parent=0 // pred_check
    _
  $region15: #{dec_mnist_forward.4} parent=0 // pred_check_branch
    %17 = sbr.rel (0) target = $region17
  $region16: #{dec_mnist_forward.4} parent=0 // pred_region
    _
  $region17: #{dec_mnist_forward.4} parent=0 // pred_fallthru
    _
  // Predicated region
  $region18: #{dec_mnist_forward.4} parent=0 // pred_check
    _
  $region19: #{dec_mnist_forward.4} parent=0 // pred_check_branch
    %19 = sbr.rel (0) target = $region21
  $region20: #{dec_mnist_forward.4} parent=0 // pred_region
    _
  $region21: #{dec_mnist_forward.4} parent=0 // pred_fallthru
    _
  %v20 = vld [vmem:[%s0] sm:$0x3]
  %v21 = vld [vmem:[%s1] sm:$0xff]
  %v22 = vld [vmem:[%s2] sm:$0x1]
  %v24 = vlaneseq
  %v25 = vshrl.u32 %v24, 7
  %v26 = vsub.s32 0, %v25
  %v27 = vrot.slane %v22, %v26
  %vm29 = vcmask 64512
  %v31 = vsel %vm29, %v20, 0
  %33 = vmatprep.subr.mxu0 0.0
  %34 = vmatpush1.msra.mxu0 %v21
  %35 = vmatprep.subr.mxu0 0.0
  %36 = vmatpush1.msra.mxu0 0.0
  %37 = vmatprep.subr.mxu0 0.0
  %38 = vmatpush1.msra.mxu0 0.0
  %39 = vmatprep.subr.mxu0 0.0
  %40 = vmatpush1.msra.mxu0 0.0
  %41 = vmatprep.subr.mxu0 0.0
  %42 = vmatpush1.msra.mxu0 0.0
  %43 = vmatprep.subr.mxu0 0.0
  %44 = vmatpush1.msra.mxu0 0.0
  %45 = vmatprep.subr.mxu0 0.0
  %46 = vmatpush1.msra.mxu0 0.0
  %47 = vmatprep.subr.mxu0 0.0
  %48 = vmatpush1.msra.mxu0 0.0
  %49 = vmatprep.subr.mxu0 0.0
  %50 = vmatpush1.msra.mxu0 0.0
  %51 = vmatprep.subr.mxu0 0.0
  %52 = vmatpush1.msra.mxu0 0.0
  %53 = vmatprep.subr.mxu0 0.0
  %54 = vmatpush1.msra.mxu0 0.0
  %55 = vmatprep.subr.mxu0 0.0
  %56 = vmatpush1.msra.mxu0 0.0
  %57 = vmatprep.subr.mxu0 0.0
  %58 = vmatpush1.msra.mxu0 0.0
  %59 = vmatprep.subr.mxu0 0.0
  %60 = vmatpush1.msra.mxu0 0.0
  %61 = vmatprep.subr.mxu0 0.0
  %62 = vmatpush1.msra.mxu0 0.0
  %63 = vmatprep.subr.mxu0 0.0
  %64 = vmatpush1.msra.mxu0 0.0
  %65 = vmatprep.subr.mxu0 0.0
  %66 = vmatpush1.msra.mxu0 0.0
  %67 = vmatprep.subr.mxu0 0.0
  %68 = vmatpush1.msra.mxu0 0.0
  %69 = vmatprep.subr.mxu0 0.0
  %70 = vmatpush1.msra.mxu0 0.0
  %71 = vmatprep.subr.mxu0 0.0
  %72 = vmatpush1.msra.mxu0 0.0
  %73 = vmatprep.subr.mxu0 0.0
  %74 = vmatpush1.msra.mxu0 0.0
  %75 = vmatprep.subr.mxu0 0.0
  %76 = vmatpush1.msra.mxu0 0.0
  %77 = vmatprep.subr.mxu0 0.0
  %78 = vmatpush1.msra.mxu0 0.0
  %79 = vmatprep.subr.mxu0 0.0
  %80 = vmatpush1.msra.mxu0 0.0
  %81 = vmatprep.subr.mxu0 0.0
  %82 = vmatpush1.msra.mxu0 0.0
  %83 = vmatprep.subr.mxu0 0.0
  %84 = vmatpush1.msra.mxu0 0.0
  %85 = vmatprep.subr.mxu0 0.0
  %86 = vmatpush1.msra.mxu0 0.0
  %87 = vmatprep.subr.mxu0 0.0
  %88 = vmatpush1.msra.mxu0 0.0
  %89 = vmatprep.subr.mxu0 0.0
  %90 = vmatpush1.msra.mxu0 0.0
  %91 = vmatprep.subr.mxu0 0.0
  %92 = vmatpush1.msra.mxu0 0.0
  %93 = vmatprep.subr.mxu0 0.0
  %94 = vmatpush1.msra.mxu0 0.0
  %95 = vmatprep.subr.mxu0 0.0
  %96 = vmatpush1.msra.mxu0 0.0
  %97 = vmatprep.mubr.f32.mxu0 0.0
  %98 = vmatmul.mubr.f32.gmra.mrb[0].mxu0 %v31
  %v99 = vpop.f32.mrb[0].mxu0
  %v100 = vadd.f32 %v27, %v99
  %v101 = vpop.f32.mrb[0].mxu0
  %102 = vdwg.mxu0
  %v103 = vmax.f32 %v100, 0.0
  %v104 = vld [vmem:[%s3] sm:$0xff]
  %v105 = vld [vmem:[%s3 + $0x8] sm:$0xff]
  %v106 = vld [vmem:[%s3 + $0x10] sm:$0xff]
  %v107 = vld [vmem:[%s3 + $0x18] sm:$0xff]
  %v108 = vld [vmem:[%s3 + $0x20] sm:$0xff]
  %v109 = vld [vmem:[%s3 + $0x28] sm:$0xff]
  %v110 = vld [vmem:[%s3 + $0x30] sm:$0xff]
  %v111 = vld [vmem:[%s3 + $0x38] sm:$0xff]
  %v112 = vld [vmem:[%s3 + $0x40] sm:$0xff]
  %v113 = vld [vmem:[%s3 + $0x48] sm:$0xff]
  %v114 = vld [vmem:[%s3 + $0x50] sm:$0xff]
  %v115 = vld [vmem:[%s3 + $0x58] sm:$0xff]
  %v116 = vld [vmem:[%s3 + $0x60] sm:$0xff]
  %v117 = vld [vmem:[%s3 + $0x68] sm:$0xff]
  %v118 = vld [vmem:[%s3 + $0x70] sm:$0xff]
  %v119 = vld [vmem:[%s3 + $0x78] sm:$0xff]
  %v120 = vld [vmem:[%s3 + $0x80] sm:$0xff]
  %v121 = vld [vmem:[%s3 + $0x88] sm:$0xff]
  %v122 = vld [vmem:[%s3 + $0x90] sm:$0xff]
  %v123 = vld [vmem:[%s3 + $0x98] sm:$0xff]
  %v124 = vld [vmem:[%s3 + $0xa0] sm:$0xff]
  %v125 = vld [vmem:[%s3 + $0xa8] sm:$0xff]
  %v126 = vld [vmem:[%s3 + $0xb0] sm:$0xff]
  %v127 = vld [vmem:[%s3 + $0xb8] sm:$0xff]
  %v128 = vld [vmem:[%s3 + $0xc0] sm:$0xff]
  %v129 = vld [vmem:[%s3 + $0xc8] sm:$0xff]
  %v130 = vld [vmem:[%s3 + $0xd0] sm:$0xff]
  %v131 = vld [vmem:[%s3 + $0xd8] sm:$0xff]
  %v132 = vld [vmem:[%s3 + $0xe0] sm:$0xff]
  %v133 = vld [vmem:[%s3 + $0xe8] sm:$0xff]
  %v134 = vld [vmem:[%s3 + $0xf0] sm:$0xff]
  %v135 = vld [vmem:[%s3 + $0xf8] sm:$0xff]
  %v136 = vld [vmem:[%s3 + $0x100] sm:$0xff]
  %v137 = vld [vmem:[%s3 + $0x108] sm:$0xff]
  %v138 = vld [vmem:[%s3 + $0x110] sm:$0xff]
  %v139 = vld [vmem:[%s3 + $0x118] sm:$0xff]
  %v140 = vld [vmem:[%s3 + $0x120] sm:$0xff]
  %v141 = vld [vmem:[%s3 + $0x128] sm:$0xff]
  %v142 = vld [vmem:[%s3 + $0x130] sm:$0xff]
  %v143 = vld [vmem:[%s3 + $0x138] sm:$0xff]
  %v144 = vld [vmem:[%s3 + $0x140] sm:$0xff]
  %v145 = vld [vmem:[%s3 + $0x148] sm:$0xff]
  %v146 = vld [vmem:[%s3 + $0x150] sm:$0xff]
  %v147 = vld [vmem:[%s3 + $0x158] sm:$0xff]
  %v148 = vld [vmem:[%s3 + $0x160] sm:$0xff]
  %v149 = vld [vmem:[%s3 + $0x168] sm:$0xff]
  %v150 = vld [vmem:[%s3 + $0x170] sm:$0xff]
  %v151 = vld [vmem:[%s3 + $0x178] sm:$0xff]
  %v152 = vld [vmem:[%s4] sm:$0x7]
  %v154 = vlaneseq
  %v155 = vshrl.u32 %v154, 7
  %v156 = vsub.s32 0, %v155
  %v157 = vrot.slane %v152, %v156
  %v158 = vlaneseq
  %v159 = vshrl.u32 %v158, 7
  %v160 = vsub.s32 1, %v159
  %v161 = vrot.slane %v152, %v160
  %v162 = vlaneseq
  %v163 = vshrl.u32 %v162, 7
  %v164 = vsub.s32 2, %v163
  %v165 = vrot.slane %v152, %v164
  %169 = vmatprep.subr.mxu0 %v105
  %170 = vmatpush1.msra.mxu0 %v104
  %171 = vmatprep.subr.mxu0 %v108
  %172 = vmatpush1.msra.mxu0 %v107
  %173 = vmatprep.subr.mxu0 %v111
  %174 = vmatpush1.msra.mxu0 %v110
  %175 = vmatprep.subr.mxu0 %v114
  %176 = vmatpush1.msra.mxu0 %v113
  %177 = vmatprep.subr.mxu0 %v117
  %178 = vmatpush1.msra.mxu0 %v116
  %179 = vmatprep.subr.mxu0 %v120
  %180 = vmatpush1.msra.mxu0 %v119
  %181 = vmatprep.subr.mxu0 %v123
  %182 = vmatpush1.msra.mxu0 %v122
  %183 = vmatprep.subr.mxu0 %v126
  %184 = vmatpush1.msra.mxu0 %v125
  %185 = vmatprep.subr.mxu0 %v129
  %186 = vmatpush1.msra.mxu0 %v128
  %187 = vmatprep.subr.mxu0 %v132
  %188 = vmatpush1.msra.mxu0 %v131
  %189 = vmatprep.subr.mxu0 %v135
  %190 = vmatpush1.msra.mxu0 %v134
  %191 = vmatprep.subr.mxu0 %v138
  %192 = vmatpush1.msra.mxu0 %v137
  %193 = vmatprep.subr.mxu0 %v141
  %194 = vmatpush1.msra.mxu0 %v140
  %195 = vmatprep.subr.mxu0 %v144
  %196 = vmatpush1.msra.mxu0 %v143
  %197 = vmatprep.subr.mxu0 %v147
  %198 = vmatpush1.msra.mxu0 %v146
  %199 = vmatprep.subr.mxu0 %v150
  %200 = vmatpush1.msra.mxu0 %v149
  %201 = vmatprep.subr.mxu0 0.0
  %202 = vmatpush1.msra.mxu0 0.0
  %203 = vmatprep.subr.mxu0 0.0
  %204 = vmatpush1.msra.mxu0 0.0
  %205 = vmatprep.subr.mxu0 0.0
  %206 = vmatpush1.msra.mxu0 0.0
  %207 = vmatprep.subr.mxu0 0.0
  %208 = vmatpush1.msra.mxu0 0.0
  %209 = vmatprep.subr.mxu0 0.0
  %210 = vmatpush1.msra.mxu0 0.0
  %211 = vmatprep.subr.mxu0 0.0
  %212 = vmatpush1.msra.mxu0 0.0
  %213 = vmatprep.subr.mxu0 0.0
  %214 = vmatpush1.msra.mxu0 0.0
  %215 = vmatprep.subr.mxu0 0.0
  %216 = vmatpush1.msra.mxu0 0.0
  %217 = vmatprep.subr.mxu0 0.0
  %218 = vmatpush1.msra.mxu0 0.0
  %219 = vmatprep.subr.mxu0 0.0
  %220 = vmatpush1.msra.mxu0 0.0
  %221 = vmatprep.subr.mxu0 0.0
  %222 = vmatpush1.msra.mxu0 0.0
  %223 = vmatprep.subr.mxu0 0.0
  %224 = vmatpush1.msra.mxu0 0.0
  %225 = vmatprep.subr.mxu0 0.0
  %226 = vmatpush1.msra.mxu0 0.0
  %227 = vmatprep.subr.mxu0 0.0
  %228 = vmatpush1.msra.mxu0 0.0
  %229 = vmatprep.subr.mxu0 0.0
  %230 = vmatpush1.msra.mxu0 0.0
  %231 = vmatprep.subr.mxu0 0.0
  %232 = vmatpush1.msra.mxu0 0.0
  %233 = vmatprep.mubr.f32.mxu0 0.0
  %234 = vmatmul.mubr.f32.gmra.mrb[0].mxu0 %v103
  %v235 = vpop.f32.mrb[0].mxu0
  %v236 = vadd.f32 %v157, %v235
  %v237 = vpop.f32.mrb[0].mxu0
  %v238 = vadd.f32 %v161, %v237
  %239 = vdwg.mxu0
  %240 = vmatprep.subr.mxu0 0.0
  %241 = vmatpush1.msra.mxu0 %v106
  %242 = vmatprep.subr.mxu0 0.0
  %243 = vmatpush1.msra.mxu0 %v109
  %244 = vmatprep.subr.mxu0 0.0
  %245 = vmatpush1.msra.mxu0 %v112
  %246 = vmatprep.subr.mxu0 0.0
  %247 = vmatpush1.msra.mxu0 %v115
  %248 = vmatprep.subr.mxu0 0.0
  %249 = vmatpush1.msra.mxu0 %v118
  %250 = vmatprep.subr.mxu0 0.0
  %251 = vmatpush1.msra.mxu0 %v121
  %252 = vmatprep.subr.mxu0 0.0
  %253 = vmatpush1.msra.mxu0 %v124
  %254 = vmatprep.subr.mxu0 0.0
  %255 = vmatpush1.msra.mxu0 %v127
  %256 = vmatprep.subr.mxu0 0.0
  %257 = vmatpush1.msra.mxu0 %v130
  %258 = vmatprep.subr.mxu0 0.0
  %259 = vmatpush1.msra.mxu0 %v133
  %260 = vmatprep.subr.mxu0 0.0
  %261 = vmatpush1.msra.mxu0 %v136
  %262 = vmatprep.subr.mxu0 0.0
  %263 = vmatpush1.msra.mxu0 %v139
  %264 = vmatprep.subr.mxu0 0.0
  %265 = vmatpush1.msra.mxu0 %v142
  %266 = vmatprep.subr.mxu0 0.0
  %267 = vmatpush1.msra.mxu0 %v145
  %268 = vmatprep.subr.mxu0 0.0
  %269 = vmatpush1.msra.mxu0 %v148
  %270 = vmatprep.subr.mxu0 0.0
  %271 = vmatpush1.msra.mxu0 %v151
  %272 = vmatprep.subr.mxu0 0.0
  %273 = vmatpush1.msra.mxu0 0.0
  %274 = vmatprep.subr.mxu0 0.0
  %275 = vmatpush1.msra.mxu0 0.0
  %276 = vmatprep.subr.mxu0 0.0
  %277 = vmatpush1.msra.mxu0 0.0
  %278 = vmatprep.subr.mxu0 0.0
  %279 = vmatpush1.msra.mxu0 0.0
  %280 = vmatprep.subr.mxu0 0.0
  %281 = vmatpush1.msra.mxu0 0.0
  %282 = vmatprep.subr.mxu0 0.0
  %283 = vmatpush1.msra.mxu0 0.0
  %284 = vmatprep.subr.mxu0 0.0
  %285 = vmatpush1.msra.mxu0 0.0
  %286 = vmatprep.subr.mxu0 0.0
  %287 = vmatpush1.msra.mxu0 0.0
  %288 = vmatprep.subr.mxu0 0.0
  %289 = vmatpush1.msra.mxu0 0.0
  %290 = vmatprep.subr.mxu0 0.0
  %291 = vmatpush1.msra.mxu0 0.0
  %292 = vmatprep.subr.mxu0 0.0
  %293 = vmatpush1.msra.mxu0 0.0
  %294 = vmatprep.subr.mxu0 0.0
  %295 = vmatpush1.msra.mxu0 0.0
  %296 = vmatprep.subr.mxu0 0.0
  %297 = vmatpush1.msra.mxu0 0.0
  %298 = vmatprep.subr.mxu0 0.0
  %299 = vmatpush1.msra.mxu0 0.0
  %300 = vmatprep.subr.mxu0 0.0
  %301 = vmatpush1.msra.mxu0 0.0
  %302 = vmatprep.subr.mxu0 0.0
  %303 = vmatpush1.msra.mxu0 0.0
  %304 = vmatprep.mubr.f32.mxu0 0.0
  %305 = vmatmul.mubr.f32.gmra.mrb[0].mxu0 %v103
  %v306 = vpop.f32.mrb[0].mxu0
  %v307 = vadd.f32 %v165, %v306
  %v308 = vpop.f32.mrb[0].mxu0
  %309 = vdwg.mxu0
  %v310 = vmax.f32 %v236, 0.0
  %v311 = vmax.f32 %v238, 0.0
  %v312 = vmax.f32 %v307, 0.0
  %v316 = vcombine.low %v310, %v311
  %v318 = vunpack.c.l.s4 1983009808
  %v319 = vunpack.c.0.s8 %v318
  %v320 = vlaneseq
  %v321 = vshrl.u32 %v320, 7
  %v322 = vsub.s32 %v319, %v321
  %v323 = vrot.slane %v316, %v322
  %v325 = vunpack.c.l.s4 1983009808
  %v326 = vunpack.c.0.s8 %v325
  %v327 = vlaneseq
  %v328 = vshrl.u32 %v327, 7
  %v329 = vsub.s32 %v326, %v328
  %v330 = vrot.slane %v312, %v329
  %v331 = vcombine.low %v323, %v330
  %333 = vst [vmem:[%s5] sm:$0x3f] %v331
  // Predicated region
  $region22: #{dec_mnist_forward.4} parent=0 // pred_check
    _
  $region23: #{dec_mnist_forward.4} parent=0 // pred_check_branch
    %335 = sbr.rel (0) target = $region25
  $region24: #{dec_mnist_forward.4} parent=0 // pred_region
    _
  $region25: #{dec_mnist_forward.4} parent=0 // pred_fallthru
    _
  // Predicated region
  $region26: #{dec_mnist_forward.4} parent=0 // pred_check
    _
  $region27: #{dec_mnist_forward.4} parent=0 // pred_check_branch
    %337 = sbr.rel (0) target = $region29
  $region28: #{dec_mnist_forward.4} parent=0 // pred_region
    _
  $region29: #{dec_mnist_forward.4} parent=0 // pred_fallthru
    _

// kernel: dec_mnist_forward.5
$region0: #{dec_mnist_forward.5}
  #allocation0 [shape = 'u32[]', space=smem, size = 0x4, offset = 0x4, fixed_abs, tag = 'smem constant byte address 0x4 - core index']
  #allocation1 [shape = 'u32[144,128]{1,0:T(1,128)}', space=vmem, size = 0x12000, scoped, tag = 'internal scratch']
  %s0 = inlined_call_operand.vmem [shape: f32[2,32,256], index: 0, kind: input, shape index: {}]
  %s1 = inlined_call_operand.vmem [shape: f32[16,288], index: 1, kind: input, shape index: {}]
  %s2 = inlined_call_operand.vmem [shape: f32[16,1], index: 2, kind: input, shape index: {}]
  %s3 = inlined_call_operand.vmem [shape: f32[2,16,128], index: 3, kind: output, shape index: {}]
  %s4 = sld [smem:[#allocation0]]
  $region45: #{dec_mnist_forward.5} parent=0
    _
  %s6 = ssub.s32 1, %s4
  %s7 = scalar_select 0, %s6, %s4
  loop: start=0, step=1, limit=4
  $region2: #{dec_mnist_forward.5} parent=0 // loop_pre_header
    _
  $region3: #{dec_mnist_forward.5} parent=0 // loop_header
    %s9 = sphi 0, %s13
    %p10 = scmp.ge.s32.totalorder %s9, 4
    %s19 = sphi 0, %s21
    %s22 = sphi 0, %s19
    %s23 = sphi 0, %s22
    %s39 = sphi 0, %s23
    %s43 = sphi 0, %s43
    %s45 = sphi 0, %s43
    %s46 = sphi 0, %s45
    %s60 = sphi 0, %s46
    %s64 = sphi 0, %s64
    %s66 = sphi 0, %s64
    %s67 = sphi 0, %s66
    %s81 = sphi 0, %s67
    %s87 = sphi 0, %s89
    %s90 = sphi 0, %s87
    %s91 = sphi 0, %s90
    %s107 = sphi 0, %s91
  $region4: #{dec_mnist_forward.5} parent=0 // loop_header_branch
    %12 = sbr.rel (%p10) target = $region8
  $region5: #{dec_mnist_forward.5} parent=0 // loop_body
    %s14 = ssub.s32 %s9, 1
    %s15 = ssub.s32 %s9, 2
    %s16 = sadd.s32 %s9, 1
    %s17 = ssub.s32 %s9, %s16
    %p18 = scmp.eq.s32.totalorder %s17, 0
    %s20 = sadd.s32 %s19, 1
    %s21 = scalar_select %p18, %s19, %s20
    %p24 = pneg %p18
    %p25 = scmp.eq.s32.totalorder %s9, 1
    %p26 = por %p24, %p25
    %p27 = scmp.ne.s32.totalorder %s19, %s22
    %p28 = scmp.eq.s32.totalorder %s9, 0
    %p29 = por %p27, %p28
    %p30 = scmp.ne.s32.totalorder %s19, %s22
    %p31 = scmp.eq.s32.totalorder %s14, 1
    %p32 = por %p30, %p31
    %p33 = scmp.ne.s32.totalorder %s22, %s23
    %p34 = scmp.eq.s32.totalorder %s14, 0
    %p35 = por %p33, %p34
    %p36 = scmp.ne.s32.totalorder %s22, %s23
    %p37 = scmp.eq.s32.totalorder %s15, 1
    %p38 = por %p36, %p37
    %p40 = scmp.ne.s32.totalorder %s23, %s39
    %p41 = scmp.eq.s32.totalorder %s15, 0
    %p42 = por %p40, %p41
    %s44 = sadd.s32 %s43, 1
    %p47 = scmp.eq.s32.totalorder %s9, 1
    %p48 = scmp.ne.s32.totalorder %s43, %s45
    %p49 = scmp.eq.s32.totalorder %s9, 0
    %p50 = por %p48, %p49
    %p51 = scmp.ne.s32.totalorder %s43, %s45
    %p52 = scmp.eq.s32.totalorder %s14, 1
    %p53 = por %p51, %p52
    %p54 = scmp.ne.s32.totalorder %s45, %s46
    %p55 = scmp.eq.s32.totalorder %s14, 0
    %p56 = por %p54, %p55
    %p57 = scmp.ne.s32.totalorder %s45, %s46
    %p58 = scmp.eq.s32.totalorder %s15, 1
    %p59 = por %p57, %p58
    %p61 = scmp.ne.s32.totalorder %s46, %s60
    %p62 = scmp.eq.s32.totalorder %s15, 0
    %p63 = por %p61, %p62
    %s65 = sadd.s32 %s64, 1
    %p68 = scmp.eq.s32.totalorder %s9, 1
    %p69 = scmp.ne.s32.totalorder %s64, %s66
    %p70 = scmp.eq.s32.totalorder %s9, 0
    %p71 = por %p69, %p70
    %p72 = scmp.ne.s32.totalorder %s64, %s66
    %p73 = scmp.eq.s32.totalorder %s14, 1
    %p74 = por %p72, %p73
    %p75 = scmp.ne.s32.totalorder %s66, %s67
    %p76 = scmp.eq.s32.totalorder %s14, 0
    %p77 = por %p75, %p76
    %p78 = scmp.ne.s32.totalorder %s66, %s67
    %p79 = scmp.eq.s32.totalorder %s15, 1
    %p80 = por %p78, %p79
    %p82 = scmp.ne.s32.totalorder %s67, %s81
    %p83 = scmp.eq.s32.totalorder %s15, 0
    %p84 = por %p82, %p83
    %s85 = ssub.s32 %s9, %s16
    %p86 = scmp.eq.s32.totalorder %s85, 0
    %s88 = sadd.s32 %s87, 1
    %s89 = scalar_select %p86, %s87, %s88
    %p92 = pneg %p86
    %p93 = scmp.eq.s32.totalorder %s9, 1
    %p94 = por %p92, %p93
    %p95 = scmp.ne.s32.totalorder %s87, %s90
    %p96 = scmp.eq.s32.totalorder %s9, 0
    %p97 = por %p95, %p96
    %p98 = scmp.ne.s32.totalorder %s87, %s90
    %p99 = scmp.eq.s32.totalorder %s14, 1
    %p100 = por %p98, %p99
    %p101 = scmp.ne.s32.totalorder %s90, %s91
    %p102 = scmp.eq.s32.totalorder %s14, 0
    %p103 = por %p101, %p102
    %p104 = scmp.ne.s32.totalorder %s90, %s91
    %p105 = scmp.eq.s32.totalorder %s15, 1
    %p106 = por %p104, %p105
    %p108 = scmp.ne.s32.totalorder %s91, %s107
    %p109 = scmp.eq.s32.totalorder %s15, 0
    %p110 = por %p108, %p109
    %p111 = scmp.le.s32.totalorder 1, %s9
    %p112 = scmp.lt.s32.totalorder %s9, 3
    %p113 = pnand %p111, %p112
    %p114 = pneg %p113
    // Predicated region
    $region9: #{dec_mnist_forward.5} parent=5 // pred_check
      _
    $region10: #{dec_mnist_forward.5} parent=5 // pred_check_branch
      %116 = sbr.rel (%p113) target = $region12
    $region11: #{dec_mnist_forward.5} parent=5 // pred_region
      %s117 = ssub.s32 %s9, 1
      // Predicated region
      $region13: #{dec_mnist_forward.5} parent=11 // pred_check
        %p118 = pneg %p56
      $region14: #{dec_mnist_forward.5} parent=11 // pred_check_branch
        %120 = sbr.rel (%p118) target = $region16
      $region15: #{dec_mnist_forward.5} parent=11 // pred_region
        _
      $region16: #{dec_mnist_forward.5} parent=11 // pred_fallthru
        _
      // Predicated region
      $region17: #{dec_mnist_forward.5} parent=11 // pred_check
        %p121 = pneg %p77
      $region18: #{dec_mnist_forward.5} parent=11 // pred_check_branch
        %123 = sbr.rel (%p121) target = $region20
      $region19: #{dec_mnist_forward.5} parent=11 // pred_region
        _
      $region20: #{dec_mnist_forward.5} parent=11 // pred_fallthru
        _
    $region12: #{dec_mnist_forward.5} parent=5 // pred_fallthru
      _
    %p124 = scmp.lt.s32.totalorder %s9, 2
    // Predicated region
    $region21: #{dec_mnist_forward.5} parent=5 // pred_check
      %p125 = pneg %p124
    $region22: #{dec_mnist_forward.5} parent=5 // pred_check_branch
      %127 = sbr.rel (%p125) target = $region24
    $region23: #{dec_mnist_forward.5} parent=5 // pred_region
      // Predicated region
      $region25: #{dec_mnist_forward.5} parent=23 // pred_check
        %p128 = pneg %p29
      $region26: #{dec_mnist_forward.5} parent=23 // pred_check_branch
        %130 = sbr.rel (%p128) target = $region28
      $region27: #{dec_mnist_forward.5} parent=23 // pred_region
        %p131 = scmp.lt.s32.totalorder %s9, 1
        %s132 = scalar_select %p131, %s9, 1
        %s133 = smul.addr %s132, 8
        %s134 = smul.addr %s133, 8
        %s135 = scalar_lea.vmem %s0, %s134
      $region28: #{dec_mnist_forward.5} parent=23 // pred_fallthru
        _
    $region24: #{dec_mnist_forward.5} parent=5 // pred_fallthru
      _
    %p136 = scmp.le.s32.totalorder 1, %s9
    %p137 = scmp.lt.s32.totalorder %s9, 3
    %p138 = pnand %p136, %p137
    %p139 = pneg %p138
    // Predicated region
    $region29: #{dec_mnist_forward.5} parent=5 // pred_check
      _
    $region30: #{dec_mnist_forward.5} parent=5 // pred_check_branch
      %141 = sbr.rel (%p138) target = $region32
    $region31: #{dec_mnist_forward.5} parent=5 // pred_region
      %s142 = ssub.s32 %s9, 1
      %p143 = scmp.lt.s32.totalorder %s14, 1
      %s144 = scalar_select %p143, %s14, 1
      %s145 = smul.addr %s144, 8
      %s146 = smul.addr %s145, 8
      %s147 = scalar_lea.vmem %s0, %s146
      %p148 = pneg %p35
      %p149 = pneg %p32
      %p150 = pneg %p56
      %p151 = pneg %p53
      %p152 = pneg %p77
      %p153 = pneg %p74
      %p154 = pneg %p103
      %p155 = pneg %p100
      %p156 = scmp.lt.s32.totalorder %s14, 1
      %s157 = scalar_select %p156, %s14, 1
      %s158 = smul.addr %s157, 2
      %s159 = smul.addr %s158, 8
      %s160 = scalar_lea.vmem %s3, %s159
      %p161 = scmp.lt.s32.totalorder %s14, 1
      %s162 = scalar_select %p161, %s14, 1
      %s163 = smul.addr %s162, 8
      %s164 = smul.addr %s163, 8
      %s165 = scalar_lea.vmem %s0, %s164
      %p166 = scmp.lt.s32.totalorder %s14, 1
      %s167 = scalar_select %p166, %s14, 1
      %s168 = smul.addr %s167, 2
      %s169 = smul.addr %s168, 8
      %s170 = scalar_lea.vmem %s3, %s169
      %v171 = vld [vmem:[%s165] sm:$0xff]
      %v172 = vld [vmem:[%s165 + $0x8] sm:$0xff]
      %v173 = vld [vmem:[%s165 + $0x10] sm:$0xff]
      %v174 = vld [vmem:[%s165 + $0x18] sm:$0xff]
      %v175 = vld [vmem:[%s165 + $0x20] sm:$0xff]
      %v176 = vld [vmem:[%s165 + $0x28] sm:$0xff]
      %v177 = vld [vmem:[%s165 + $0x30] sm:$0xff]
      %v178 = vld [vmem:[%s165 + $0x38] sm:$0xff]
      %187 = vrot.lane.b32.xlu0 %v171, 127
      %v188 = vpop.permute.xlu0 %187
      %189 = vrot.lane.b32.xlu0 %v172, 127
      %v190 = vpop.permute.xlu0 %189
      %191 = vrot.lane.b32.xlu0 %v173, 127
      %v192 = vpop.permute.xlu0 %191
      %193 = vrot.lane.b32.xlu0 %v174, 127
      %v194 = vpop.permute.xlu0 %193
      %195 = vrot.lane.b32.xlu0 %v175, 127
      %v196 = vpop.permute.xlu0 %195
      %197 = vrot.lane.b32.xlu0 %v176, 127
      %v198 = vpop.permute.xlu0 %197
      %199 = vrot.lane.b32.xlu0 %v177, 127
      %v200 = vpop.permute.xlu0 %199
      %201 = vrot.lane.b32.xlu0 %v178, 127
      %v202 = vpop.permute.xlu0 %201
      %vm203 = vcmask 1039360
      %v204 = vsel %vm203, %v188, %v190
      %v205 = vsel %vm203, %v192, %v194
      %v206 = vsel %vm203, %v196, %v198
      %v207 = vsel %vm203, %v200, %v202
      %212 = vrot.lane.b32.xlu0 %v171, 126
      %v213 = vpop.permute.xlu0 %212
      %214 = vrot.lane.b32.xlu0 %v172, 126
      %v215 = vpop.permute.xlu0 %214
      %216 = vrot.lane.b32.xlu0 %v173, 126
      %v217 = vpop.permute.xlu0 %216
      %218 = vrot.lane.b32.xlu0 %v174, 126
      %v219 = vpop.permute.xlu0 %218
      %220 = vrot.lane.b32.xlu0 %v175, 126
      %v221 = vpop.permute.xlu0 %220
      %222 = vrot.lane.b32.xlu0 %v176, 126
      %v223 = vpop.permute.xlu0 %222
      %224 = vrot.lane.b32.xlu0 %v177, 126
      %v225 = vpop.permute.xlu0 %224
      %226 = vrot.lane.b32.xlu0 %v178, 126
      %v227 = vpop.permute.xlu0 %226
      %vm228 = vcmask 1031168
      %v229 = vsel %vm228, %v213, %v215
      %v230 = vsel %vm228, %v217, %v219
      %v231 = vsel %vm228, %v221, %v223
      %v232 = vsel %vm228, %v225, %v227
      %237 = vrot.lane.b32.xlu0 %v171, 119
      %v238 = vpop.permute.xlu0 %237
      %239 = vrot.lane.b32.xlu0 %v172, 119
      %v240 = vpop.permute.xlu0 %239
      %241 = vrot.lane.b32.xlu0 %v173, 119
      %v242 = vpop.permute.xlu0 %241
      %243 = vrot.lane.b32.xlu0 %v174, 119
      %v244 = vpop.permute.xlu0 %243
      %245 = vrot.lane.b32.xlu0 %v175, 119
      %v246 = vpop.permute.xlu0 %245
      %247 = vrot.lane.b32.xlu0 %v176, 119
      %v248 = vpop.permute.xlu0 %247
      %249 = vrot.lane.b32.xlu0 %v177, 119
      %v250 = vpop.permute.xlu0 %249
      %251 = vrot.lane.b32.xlu0 %v178, 119
      %v252 = vpop.permute.xlu0 %251
      %vm253 = vcmask 973824
      %v254 = vsel %vm253, %v238, %v240
      %v255 = vsel %vm253, %v242, %v244
      %v256 = vsel %vm253, %v246, %v248
      %v257 = vsel %vm253, %v250, %v252
      %262 = vrot.lane.b32.xlu0 %v171, 118
      %v263 = vpop.permute.xlu0 %262
      %264 = vrot.lane.b32.xlu0 %v172, 118
      %v265 = vpop.permute.xlu0 %264
      %266 = vrot.lane.b32.xlu0 %v173, 118
      %v267 = vpop.permute.xlu0 %266
      %268 = vrot.lane.b32.xlu0 %v174, 118
      %v269 = vpop.permute.xlu0 %268
      %270 = vrot.lane.b32.xlu0 %v175, 118
      %v271 = vpop.permute.xlu0 %270
      %272 = vrot.lane.b32.xlu0 %v176, 118
      %v273 = vpop.permute.xlu0 %272
      %274 = vrot.lane.b32.xlu0 %v177, 118
      %v275 = vpop.permute.xlu0 %274
      %276 = vrot.lane.b32.xlu0 %v178, 118
      %v277 = vpop.permute.xlu0 %276
      %vm278 = vcmask 965632
      %v279 = vsel %vm278, %v263, %v265
      %v280 = vsel %vm278, %v267, %v269
      %v281 = vsel %vm278, %v271, %v273
      %v282 = vsel %vm278, %v275, %v277
      %287 = vrot.lane.b32.xlu0 %v171, 117
      %v288 = vpop.permute.xlu0 %287
      %289 = vrot.lane.b32.xlu0 %v172, 117
      %v290 = vpop.permute.xlu0 %289
      %291 = vrot.lane.b32.xlu0 %v173, 117
      %v292 = vpop.permute.xlu0 %291
      %293 = vrot.lane.b32.xlu0 %v174, 117
      %v294 = vpop.permute.xlu0 %293
      %295 = vrot.lane.b32.xlu0 %v175, 117
      %v296 = vpop.permute.xlu0 %295
      %297 = vrot.lane.b32.xlu0 %v176, 117
      %v298 = vpop.permute.xlu0 %297
      %299 = vrot.lane.b32.xlu0 %v177, 117
      %v300 = vpop.permute.xlu0 %299
      %301 = vrot.lane.b32.xlu0 %v178, 117
      %v302 = vpop.permute.xlu0 %301
      %vm303 = vcmask 957440
      %v304 = vsel %vm303, %v288, %v290
      %v305 = vsel %vm303, %v292, %v294
      %v306 = vsel %vm303, %v296, %v298
      %v307 = vsel %vm303, %v300, %v302
      %312 = vrot.lane.b32.xlu0 %v171, 110
      %v313 = vpop.permute.xlu0 %312
      %314 = vrot.lane.b32.xlu0 %v172, 110
      %v315 = vpop.permute.xlu0 %314
      %316 = vrot.lane.b32.xlu0 %v173, 110
      %v317 = vpop.permute.xlu0 %316
      %318 = vrot.lane.b32.xlu0 %v174, 110
      %v319 = vpop.permute.xlu0 %318
      %320 = vrot.lane.b32.xlu0 %v175, 110
      %v321 = vpop.permute.xlu0 %320
      %322 = vrot.lane.b32.xlu0 %v176, 110
      %v323 = vpop.permute.xlu0 %322
      %324 = vrot.lane.b32.xlu0 %v177, 110
      %v325 = vpop.permute.xlu0 %324
      %326 = vrot.lane.b32.xlu0 %v178, 110
      %v327 = vpop.permute.xlu0 %326
      %vm328 = vcmask 900096
      %v329 = vsel %vm328, %v313, %v315
      %v330 = vsel %vm328, %v317, %v319
      %v331 = vsel %vm328, %v321, %v323
      %v332 = vsel %vm328, %v325, %v327
      %337 = vrot.lane.b32.xlu0 %v171, 109
      %v338 = vpop.permute.xlu0 %337
      %339 = vrot.lane.b32.xlu0 %v172, 109
      %v340 = vpop.permute.xlu0 %339
      %341 = vrot.lane.b32.xlu0 %v173, 109
      %v342 = vpop.permute.xlu0 %341
      %343 = vrot.lane.b32.xlu0 %v174, 109
      %v344 = vpop.permute.xlu0 %343
      %345 = vrot.lane.b32.xlu0 %v175, 109
      %v346 = vpop.permute.xlu0 %345
      %347 = vrot.lane.b32.xlu0 %v176, 109
      %v348 = vpop.permute.xlu0 %347
      %349 = vrot.lane.b32.xlu0 %v177, 109
      %v350 = vpop.permute.xlu0 %349
      %351 = vrot.lane.b32.xlu0 %v178, 109
      %v352 = vpop.permute.xlu0 %351
      %vm353 = vcmask 891904
      %v354 = vsel %vm353, %v338, %v340
      %v355 = vsel %vm353, %v342, %v344
      %v356 = vsel %vm353, %v346, %v348
      %v357 = vsel %vm353, %v350, %v352
      %362 = vrot.lane.b32.xlu0 %v171, 108
      %v363 = vpop.permute.xlu0 %362
      %364 = vrot.lane.b32.xlu0 %v172, 108
      %v365 = vpop.permute.xlu0 %364
      %366 = vrot.lane.b32.xlu0 %v173, 108
      %v367 = vpop.permute.xlu0 %366
      %368 = vrot.lane.b32.xlu0 %v174, 108
      %v369 = vpop.permute.xlu0 %368
      %370 = vrot.lane.b32.xlu0 %v175, 108
      %v371 = vpop.permute.xlu0 %370
      %372 = vrot.lane.b32.xlu0 %v176, 108
      %v373 = vpop.permute.xlu0 %372
      %374 = vrot.lane.b32.xlu0 %v177, 108
      %v375 = vpop.permute.xlu0 %374
      %376 = vrot.lane.b32.xlu0 %v178, 108
      %v377 = vpop.permute.xlu0 %376
      %vm378 = vcmask 883712
      %v379 = vsel %vm378, %v363, %v365
      %v380 = vsel %vm378, %v367, %v369
      %v381 = vsel %vm378, %v371, %v373
      %v382 = vsel %vm378, %v375, %v377
      %v387 = vld [vmem:[%s1] sm:$0xff]
      %v388 = vld [vmem:[%s1 + $0x8] sm:$0xff]
      %v389 = vld [vmem:[%s1 + $0x10] sm:$0xff]
      %v390 = vld [vmem:[%s1 + $0x18] sm:$0xff]
      %v391 = vld [vmem:[%s1 + $0x20] sm:$0xff]
      %v392 = vld [vmem:[%s1 + $0x28] sm:$0xff]
      %v393 = vld [vmem:[%s2] sm:$0xff]
      %v394 = vld [vmem:[%s2 + $0x8] sm:$0xff]
      %396 = vset.pattern.permute.xlu0 0
      %397 = vperm.xlu0 %396, %v393
      %v398 = vpop.permute.xlu0 %397
      %401 = vset.pattern.permute.xlu0 0
      %402 = vperm.xlu0 %401, %v394
      %v403 = vpop.permute.xlu0 %402
      %vm405 = vcmask 261120
      %v407 = vsel %vm405, %v389, 0
      %v410 = vsel %vm405, %v392, 0
      %412 = vmatprep.subr.mxu0 0.0
      %413 = vmatpush1.msra.mxu0 %v171
      %414 = vmatprep.subr.mxu0 0.0
      %415 = vmatpush1.msra.mxu0 %v173
      %416 = vmatprep.subr.mxu0 0.0
      %417 = vmatpush1.msra.mxu0 %v175
      %418 = vmatprep.subr.mxu0 0.0
      %419 = vmatpush1.msra.mxu0 %v177
      %420 = vmatprep.subr.mxu0 0.0
      %421 = vmatpush1.msra.mxu0 %v204
      %422 = vmatprep.subr.mxu0 0.0
      %423 = vmatpush1.msra.mxu0 %v205
      %424 = vmatprep.subr.mxu0 0.0
      %425 = vmatpush1.msra.mxu0 %v206
      %426 = vmatprep.subr.mxu0 0.0
      %427 = vmatpush1.msra.mxu0 %v207
      %428 = vmatprep.subr.mxu0 0.0
      %429 = vmatpush1.msra.mxu0 %v229
      %430 = vmatprep.subr.mxu0 0.0
      %431 = vmatpush1.msra.mxu0 %v230
      %432 = vmatprep.subr.mxu0 0.0
      %433 = vmatpush1.msra.mxu0 %v231
      %434 = vmatprep.subr.mxu0 0.0
      %435 = vmatpush1.msra.mxu0 %v232
      %436 = vmatprep.subr.mxu0 0.0
      %437 = vmatpush1.msra.mxu0 %v254
      %438 = vmatprep.subr.mxu0 0.0
      %439 = vmatpush1.msra.mxu0 %v255
      %440 = vmatprep.subr.mxu0 0.0
      %441 = vmatpush1.msra.mxu0 %v256
      %442 = vmatprep.subr.mxu0 0.0
      %443 = vmatpush1.msra.mxu0 %v257
      %444 = vmatprep.subr.mxu0 0.0
      %445 = vmatpush1.msra.mxu0 %v279
      %446 = vmatprep.subr.mxu0 0.0
      %447 = vmatpush1.msra.mxu0 %v280
      %448 = vmatprep.subr.mxu0 0.0
      %449 = vmatpush1.msra.mxu0 %v281
      %450 = vmatprep.subr.mxu0 0.0
      %451 = vmatpush1.msra.mxu0 %v282
      %452 = vmatprep.subr.mxu0 0.0
      %453 = vmatpush1.msra.mxu0 %v304
      %454 = vmatprep.subr.mxu0 0.0
      %455 = vmatpush1.msra.mxu0 %v305
      %456 = vmatprep.subr.mxu0 0.0
      %457 = vmatpush1.msra.mxu0 %v306
      %458 = vmatprep.subr.mxu0 0.0
      %459 = vmatpush1.msra.mxu0 %v307
      %460 = vmatprep.subr.mxu0 0.0
      %461 = vmatpush1.msra.mxu0 %v329
      %462 = vmatprep.subr.mxu0 0.0
      %463 = vmatpush1.msra.mxu0 %v330
      %464 = vmatprep.subr.mxu0 0.0
      %465 = vmatpush1.msra.mxu0 %v331
      %466 = vmatprep.subr.mxu0 0.0
      %467 = vmatpush1.msra.mxu0 %v332
      %468 = vmatprep.subr.mxu0 0.0
      %469 = vmatpush1.msra.mxu0 %v354
      %470 = vmatprep.subr.mxu0 0.0
      %471 = vmatpush1.msra.mxu0 %v355
      %472 = vmatprep.subr.mxu0 0.0
      %473 = vmatpush1.msra.mxu0 %v356
      %474 = vmatprep.subr.mxu0 0.0
      %475 = vmatpush1.msra.mxu0 %v357
      %476 = vmatprep.mubr.f32.mxu0 %v388
      %477 = vmatmul.mubr.f32.gmra.mrb[0].mxu0 %v387
      %v478 = vpop.f32.mrb[0].mxu0
      %v479 = vadd.f32 %v398, %v478
      %v480 = vpop.f32.mrb[0].mxu0
      %481 = vmatprep.mubr.f32.mxu0 %v391
      %482 = vmatmul.mubr.f32.gmra.mrb[0].mxu0 %v390
      %v483 = vpop.f32.mrb[0].mxu0
      %v484 = vadd.f32 %v403, %v483
      %v485 = vpop.f32.mrb[0].mxu0
      %486 = vdwg.mxu0
      %487 = vmatprep.subr.mxu0 0.0
      %488 = vmatpush1.msra.mxu0 %v379
      %489 = vmatprep.subr.mxu0 0.0
      %490 = vmatpush1.msra.mxu0 %v380
      %491 = vmatprep.subr.mxu0 0.0
      %492 = vmatpush1.msra.mxu0 %v381
      %493 = vmatprep.subr.mxu0 0.0
      %494 = vmatpush1.msra.mxu0 %v382
      %495 = vmatprep.subr.mxu0 0.0
      %496 = vmatpush1.msra.mxu0 0.0
      %497 = vmatprep.subr.mxu0 0.0
      %498 = vmatpush1.msra.mxu0 0.0
      %499 = vmatprep.subr.mxu0 0.0
      %500 = vmatpush1.msra.mxu0 0.0
      %501 = vmatprep.subr.mxu0 0.0
      %502 = vmatpush1.msra.mxu0 0.0
      %503 = vmatprep.subr.mxu0 0.0
      %504 = vmatpush1.msra.mxu0 0.0
      %505 = vmatprep.subr.mxu0 0.0
      %506 = vmatpush1.msra.mxu0 0.0
      %507 = vmatprep.subr.mxu0 0.0
      %508 = vmatpush1.msra.mxu0 0.0
      %509 = vmatprep.subr.mxu0 0.0
      %510 = vmatpush1.msra.mxu0 0.0
      %511 = vmatprep.subr.mxu0 0.0
      %512 = vmatpush1.msra.mxu0 0.0
      %513 = vmatprep.subr.mxu0 0.0
      %514 = vmatpush1.msra.mxu0 0.0
      %515 = vmatprep.subr.mxu0 0.0
      %516 = vmatpush1.msra.mxu0 0.0
      %517 = vmatprep.subr.mxu0 0.0
      %518 = vmatpush1.msra.mxu0 0.0
      %519 = vmatprep.subr.mxu0 0.0
      %520 = vmatpush1.msra.mxu0 0.0
      %521 = vmatprep.subr.mxu0 0.0
      %522 = vmatpush1.msra.mxu0 0.0
      %523 = vmatprep.subr.mxu0 0.0
      %524 = vmatpush1.msra.mxu0 0.0
      %525 = vmatprep.subr.mxu0 0.0
      %526 = vmatpush1.msra.mxu0 0.0
      %527 = vmatprep.subr.mxu0 0.0
      %528 = vmatpush1.msra.mxu0 0.0
      %529 = vmatprep.subr.mxu0 0.0
      %530 = vmatpush1.msra.mxu0 0.0
      %531 = vmatprep.subr.mxu0 0.0
      %532 = vmatpush1.msra.mxu0 0.0
      %533 = vmatprep.subr.mxu0 0.0
      %534 = vmatpush1.msra.mxu0 0.0
      %535 = vmatprep.subr.mxu0 0.0
      %536 = vmatpush1.msra.mxu0 0.0
      %537 = vmatprep.subr.mxu0 0.0
      %538 = vmatpush1.msra.mxu0 0.0
      %539 = vmatprep.subr.mxu0 0.0
      %540 = vmatpush1.msra.mxu0 0.0
      %541 = vmatprep.subr.mxu0 0.0
      %542 = vmatpush1.msra.mxu0 0.0
      %543 = vmatprep.subr.mxu0 0.0
      %544 = vmatpush1.msra.mxu0 0.0
      %545 = vmatprep.subr.mxu0 0.0
      %546 = vmatpush1.msra.mxu0 0.0
      %547 = vmatprep.subr.mxu0 0.0
      %548 = vmatpush1.msra.mxu0 0.0
      %549 = vmatprep.subr.mxu0 0.0
      %550 = vmatpush1.msra.mxu0 0.0
      %551 = vmatprep.mubr.f32.mxu0 0.0
      %552 = vmatmul.mubr.f32.gmra.mrb[0].mxu0 %v407
      %v553 = vpop.f32.mrb[0].mxu0
      %v554 = vadd.f32 %v479, %v553
      %v555 = vpop.f32.mrb[0].mxu0
      %556 = vmatprep.mubr.f32.mxu0 0.0
      %557 = vmatmul.mubr.f32.gmra.mrb[0].mxu0 %v410
      %v558 = vpop.f32.mrb[0].mxu0
      %v559 = vadd.f32 %v484, %v558
      %v560 = vpop.f32.mrb[0].mxu0
      %561 = vdwg.mxu0
      %v562 = vmax.f32 %v554, 0.0
      %v563 = vmax.f32 %v559, 0.0
      %564 = vst [vmem:[%s170] sm:$0xff] %v562
      %565 = vst [vmem:[%s170 + $0x8] sm:$0xff] %v563
      %p566 = scmp.lt.s32.totalorder %s14, 1
      %s567 = scalar_select %p566, %s14, 1
      %s568 = smul.addr %s567, 2
      %s569 = smul.addr %s568, 8
      %s570 = scalar_lea.vmem %s3, %s569
      // Predicated region
      $region33: #{dec_mnist_forward.5} parent=31 // pred_check
        %p571 = pneg %p100
      $region34: #{dec_mnist_forward.5} parent=31 // pred_check_branch
        %573 = sbr.rel (%p571) target = $region36
      $region35: #{dec_mnist_forward.5} parent=31 // pred_region
        _
      $region36: #{dec_mnist_forward.5} parent=31 // pred_fallthru
        _
    $region32: #{dec_mnist_forward.5} parent=5 // pred_fallthru
      _
    %p574 = scmp.le.s32.totalorder 2, %s9
    // Predicated region
    $region37: #{dec_mnist_forward.5} parent=5 // pred_check
      %p575 = pneg %p574
    $region38: #{dec_mnist_forward.5} parent=5 // pred_check_branch
      %577 = sbr.rel (%p575) target = $region40
    $region39: #{dec_mnist_forward.5} parent=5 // pred_region
      %s578 = ssub.s32 %s9, 2
      // Predicated region
      $region41: #{dec_mnist_forward.5} parent=39 // pred_check
        %p579 = pneg %p106
      $region42: #{dec_mnist_forward.5} parent=39 // pred_check_branch
        %581 = sbr.rel (%p579) target = $region44
      $region43: #{dec_mnist_forward.5} parent=39 // pred_region
        %p582 = scmp.lt.s32.totalorder %s15, 1
        %s583 = scalar_select %p582, %s15, 1
        %s584 = smul.addr %s583, 2
        %s585 = smul.addr %s584, 8
        %s586 = scalar_lea.vmem %s3, %s585
      $region44: #{dec_mnist_forward.5} parent=39 // pred_fallthru
        _
    $region40: #{dec_mnist_forward.5} parent=5 // pred_fallthru
      _
  $region6: #{dec_mnist_forward.5} parent=0 // loop_footer
    %s13 = sadd.s32 1, %s9
  $region7: #{dec_mnist_forward.5} parent=0 // loop_footer_branch
    %8 = sbr.rel target = $region3
  $region8: #{dec_mnist_forward.5} parent=0 // loop_exit
    _

// kernel: dec_mnist_forward.6
$region0: #{dec_mnist_forward.6}
  #allocation0 [shape = 'u32[]', space=smem, size = 0x4, offset = 0x4, fixed_abs, tag = 'smem constant byte address 0x4 - core index']
  #allocation1 [shape = 'u32[144,128]{1,0:T(1,128)}', space=vmem, size = 0x12000, scoped, tag = 'internal scratch']
  %s0 = inlined_call_operand.vmem [shape: f32[2,16,384], index: 0, kind: input, shape index: {}]
  %s1 = inlined_call_operand.vmem [shape: f32[8,144], index: 1, kind: input, shape index: {}]
  %s2 = inlined_call_operand.vmem [shape: f32[8,1], index: 2, kind: input, shape index: {}]
  %s3 = inlined_call_operand.vmem [shape: f32[2,8,256], index: 3, kind: output, shape index: {}]
  %s4 = sld [smem:[#allocation0]]
  $region45: #{dec_mnist_forward.6} parent=0
    _
  %s6 = ssub.s32 1, %s4
  %s7 = scalar_select 0, %s6, %s4
  loop: start=0, step=1, limit=4
  $region2: #{dec_mnist_forward.6} parent=0 // loop_pre_header
    _
  $region3: #{dec_mnist_forward.6} parent=0 // loop_header
    %s9 = sphi 0, %s13
    %p10 = scmp.ge.s32.totalorder %s9, 4
    %s19 = sphi 0, %s21
    %s22 = sphi 0, %s19
    %s23 = sphi 0, %s22
    %s39 = sphi 0, %s23
    %s43 = sphi 0, %s43
    %s45 = sphi 0, %s43
    %s46 = sphi 0, %s45
    %s60 = sphi 0, %s46
    %s64 = sphi 0, %s64
    %s66 = sphi 0, %s64
    %s67 = sphi 0, %s66
    %s81 = sphi 0, %s67
    %s87 = sphi 0, %s89
    %s90 = sphi 0, %s87
    %s91 = sphi 0, %s90
    %s107 = sphi 0, %s91
  $region4: #{dec_mnist_forward.6} parent=0 // loop_header_branch
    %12 = sbr.rel (%p10) target = $region8
  $region5: #{dec_mnist_forward.6} parent=0 // loop_body
    %s14 = ssub.s32 %s9, 1
    %s15 = ssub.s32 %s9, 2
    %s16 = sadd.s32 %s9, 1
    %s17 = ssub.s32 %s9, %s16
    %p18 = scmp.eq.s32.totalorder %s17, 0
    %s20 = sadd.s32 %s19, 1
    %s21 = scalar_select %p18, %s19, %s20
    %p24 = pneg %p18
    %p25 = scmp.eq.s32.totalorder %s9, 1
    %p26 = por %p24, %p25
    %p27 = scmp.ne.s32.totalorder %s19, %s22
    %p28 = scmp.eq.s32.totalorder %s9, 0
    %p29 = por %p27, %p28
    %p30 = scmp.ne.s32.totalorder %s19, %s22
    %p31 = scmp.eq.s32.totalorder %s14, 1
    %p32 = por %p30, %p31
    %p33 = scmp.ne.s32.totalorder %s22, %s23
    %p34 = scmp.eq.s32.totalorder %s14, 0
    %p35 = por %p33, %p34
    %p36 = scmp.ne.s32.totalorder %s22, %s23
    %p37 = scmp.eq.s32.totalorder %s15, 1
    %p38 = por %p36, %p37
    %p40 = scmp.ne.s32.totalorder %s23, %s39
    %p41 = scmp.eq.s32.totalorder %s15, 0
    %p42 = por %p40, %p41
    %s44 = sadd.s32 %s43, 1
    %p47 = scmp.eq.s32.totalorder %s9, 1
    %p48 = scmp.ne.s32.totalorder %s43, %s45
    %p49 = scmp.eq.s32.totalorder %s9, 0
    %p50 = por %p48, %p49
    %p51 = scmp.ne.s32.totalorder %s43, %s45
    %p52 = scmp.eq.s32.totalorder %s14, 1
    %p53 = por %p51, %p52
    %p54 = scmp.ne.s32.totalorder %s45, %s46
    %p55 = scmp.eq.s32.totalorder %s14, 0
    %p56 = por %p54, %p55
    %p57 = scmp.ne.s32.totalorder %s45, %s46
    %p58 = scmp.eq.s32.totalorder %s15, 1
    %p59 = por %p57, %p58
    %p61 = scmp.ne.s32.totalorder %s46, %s60
    %p62 = scmp.eq.s32.totalorder %s15, 0
    %p63 = por %p61, %p62
    %s65 = sadd.s32 %s64, 1
    %p68 = scmp.eq.s32.totalorder %s9, 1
    %p69 = scmp.ne.s32.totalorder %s64, %s66
    %p70 = scmp.eq.s32.totalorder %s9, 0
    %p71 = por %p69, %p70
    %p72 = scmp.ne.s32.totalorder %s64, %s66
    %p73 = scmp.eq.s32.totalorder %s14, 1
    %p74 = por %p72, %p73
    %p75 = scmp.ne.s32.totalorder %s66, %s67
    %p76 = scmp.eq.s32.totalorder %s14, 0
    %p77 = por %p75, %p76
    %p78 = scmp.ne.s32.totalorder %s66, %s67
    %p79 = scmp.eq.s32.totalorder %s15, 1
    %p80 = por %p78, %p79
    %p82 = scmp.ne.s32.totalorder %s67, %s81
    %p83 = scmp.eq.s32.totalorder %s15, 0
    %p84 = por %p82, %p83
    %s85 = ssub.s32 %s9, %s16
    %p86 = scmp.eq.s32.totalorder %s85, 0
    %s88 = sadd.s32 %s87, 1
    %s89 = scalar_select %p86, %s87, %s88
    %p92 = pneg %p86
    %p93 = scmp.eq.s32.totalorder %s9, 1
    %p94 = por %p92, %p93
    %p95 = scmp.ne.s32.totalorder %s87, %s90
    %p96 = scmp.eq.s32.totalorder %s9, 0
    %p97 = por %p95, %p96
    %p98 = scmp.ne.s32.totalorder %s87, %s90
    %p99 = scmp.eq.s32.totalorder %s14, 1
    %p100 = por %p98, %p99
    %p101 = scmp.ne.s32.totalorder %s90, %s91
    %p102 = scmp.eq.s32.totalorder %s14, 0
    %p103 = por %p101, %p102
    %p104 = scmp.ne.s32.totalorder %s90, %s91
    %p105 = scmp.eq.s32.totalorder %s15, 1
    %p106 = por %p104, %p105
    %p108 = scmp.ne.s32.totalorder %s91, %s107
    %p109 = scmp.eq.s32.totalorder %s15, 0
    %p110 = por %p108, %p109
    %p111 = scmp.le.s32.totalorder 1, %s9
    %p112 = scmp.lt.s32.totalorder %s9, 3
    %p113 = pnand %p111, %p112
    %p114 = pneg %p113
    // Predicated region
    $region9: #{dec_mnist_forward.6} parent=5 // pred_check
      _
    $region10: #{dec_mnist_forward.6} parent=5 // pred_check_branch
      %116 = sbr.rel (%p113) target = $region12
    $region11: #{dec_mnist_forward.6} parent=5 // pred_region
      %s117 = ssub.s32 %s9, 1
      // Predicated region
      $region13: #{dec_mnist_forward.6} parent=11 // pred_check
        %p118 = pneg %p56
      $region14: #{dec_mnist_forward.6} parent=11 // pred_check_branch
        %120 = sbr.rel (%p118) target = $region16
      $region15: #{dec_mnist_forward.6} parent=11 // pred_region
        _
      $region16: #{dec_mnist_forward.6} parent=11 // pred_fallthru
        _
      // Predicated region
      $region17: #{dec_mnist_forward.6} parent=11 // pred_check
        %p121 = pneg %p77
      $region18: #{dec_mnist_forward.6} parent=11 // pred_check_branch
        %123 = sbr.rel (%p121) target = $region20
      $region19: #{dec_mnist_forward.6} parent=11 // pred_region
        _
      $region20: #{dec_mnist_forward.6} parent=11 // pred_fallthru
        _
    $region12: #{dec_mnist_forward.6} parent=5 // pred_fallthru
      _
    %p124 = scmp.lt.s32.totalorder %s9, 2
    // Predicated region
    $region21: #{dec_mnist_forward.6} parent=5 // pred_check
      %p125 = pneg %p124
    $region22: #{dec_mnist_forward.6} parent=5 // pred_check_branch
      %127 = sbr.rel (%p125) target = $region24
    $region23: #{dec_mnist_forward.6} parent=5 // pred_region
      // Predicated region
      $region25: #{dec_mnist_forward.6} parent=23 // pred_check
        %p128 = pneg %p29
      $region26: #{dec_mnist_forward.6} parent=23 // pred_check_branch
        %130 = sbr.rel (%p128) target = $region28
      $region27: #{dec_mnist_forward.6} parent=23 // pred_region
        %p131 = scmp.lt.s32.totalorder %s9, 1
        %s132 = scalar_select %p131, %s9, 1
        %s133 = smul.addr %s132, 6
        %s134 = smul.addr %s133, 8
        %s135 = scalar_lea.vmem %s0, %s134
      $region28: #{dec_mnist_forward.6} parent=23 // pred_fallthru
        _
    $region24: #{dec_mnist_forward.6} parent=5 // pred_fallthru
      _
    %p136 = scmp.le.s32.totalorder 1, %s9
    %p137 = scmp.lt.s32.totalorder %s9, 3
    %p138 = pnand %p136, %p137
    %p139 = pneg %p138
    // Predicated region
    $region29: #{dec_mnist_forward.6} parent=5 // pred_check
      _
    $region30: #{dec_mnist_forward.6} parent=5 // pred_check_branch
      %141 = sbr.rel (%p138) target = $region32
    $region31: #{dec_mnist_forward.6} parent=5 // pred_region
      %s142 = ssub.s32 %s9, 1
      %p143 = scmp.lt.s32.totalorder %s14, 1
      %s144 = scalar_select %p143, %s14, 1
      %s145 = smul.addr %s144, 6
      %s146 = smul.addr %s145, 8
      %s147 = scalar_lea.vmem %s0, %s146
      %p148 = pneg %p35
      %p149 = pneg %p32
      %p150 = pneg %p56
      %p151 = pneg %p53
      %p152 = pneg %p77
      %p153 = pneg %p74
      %p154 = pneg %p103
      %p155 = pneg %p100
      %p156 = scmp.lt.s32.totalorder %s14, 1
      %s157 = scalar_select %p156, %s14, 1
      %s158 = smul.addr %s157, 2
      %s159 = smul.addr %s158, 8
      %s160 = scalar_lea.vmem %s3, %s159
      %p161 = scmp.lt.s32.totalorder %s14, 1
      %s162 = scalar_select %p161, %s14, 1
      %s163 = smul.addr %s162, 6
      %s164 = smul.addr %s163, 8
      %s165 = scalar_lea.vmem %s0, %s164
      %p166 = scmp.lt.s32.totalorder %s14, 1
      %s167 = scalar_select %p166, %s14, 1
      %s168 = smul.addr %s167, 2
      %s169 = smul.addr %s168, 8
      %s170 = scalar_lea.vmem %s3, %s169
      %v171 = vld [vmem:[%s165] sm:$0xff]
      %v172 = vld [vmem:[%s165 + $0x8] sm:$0xff]
      %v173 = vld [vmem:[%s165 + $0x10] sm:$0xff]
      %v174 = vld [vmem:[%s165 + $0x18] sm:$0xff]
      %v175 = vld [vmem:[%s165 + $0x20] sm:$0xff]
      %v176 = vld [vmem:[%s165 + $0x28] sm:$0xff]
      %183 = vrot.lane.b32.xlu0 %v171, 127
      %v184 = vpop.permute.xlu0 %183
      %185 = vrot.lane.b32.xlu0 %v172, 127
      %v186 = vpop.permute.xlu0 %185
      %187 = vrot.lane.b32.xlu0 %v173, 127
      %v188 = vpop.permute.xlu0 %187
      %189 = vrot.lane.b32.xlu0 %v174, 127
      %v190 = vpop.permute.xlu0 %189
      %191 = vrot.lane.b32.xlu0 %v175, 127
      %v192 = vpop.permute.xlu0 %191
      %193 = vrot.lane.b32.xlu0 %v176, 127
      %v194 = vpop.permute.xlu0 %193
      %vm195 = vcmask 1039360
      %v196 = vsel %vm195, %v184, %v186
      %v197 = vsel %vm195, %v186, %v188
      %v198 = vsel %vm195, %v190, %v192
      %v199 = vsel %vm195, %v192, %v194
      %204 = vrot.lane.b32.xlu0 %v171, 126
      %v205 = vpop.permute.xlu0 %204
      %206 = vrot.lane.b32.xlu0 %v172, 126
      %v207 = vpop.permute.xlu0 %206
      %208 = vrot.lane.b32.xlu0 %v173, 126
      %v209 = vpop.permute.xlu0 %208
      %210 = vrot.lane.b32.xlu0 %v174, 126
      %v211 = vpop.permute.xlu0 %210
      %212 = vrot.lane.b32.xlu0 %v175, 126
      %v213 = vpop.permute.xlu0 %212
      %214 = vrot.lane.b32.xlu0 %v176, 126
      %v215 = vpop.permute.xlu0 %214
      %vm216 = vcmask 1031168
      %v217 = vsel %vm216, %v205, %v207
      %v218 = vsel %vm216, %v207, %v209
      %v219 = vsel %vm216, %v211, %v213
      %v220 = vsel %vm216, %v213, %v215
      %225 = vrot.lane.b32.xlu0 %v171, 112
      %v226 = vpop.permute.xlu0 %225
      %227 = vrot.lane.b32.xlu0 %v172, 112
      %v228 = vpop.permute.xlu0 %227
      %229 = vrot.lane.b32.xlu0 %v173, 112
      %v230 = vpop.permute.xlu0 %229
      %231 = vrot.lane.b32.xlu0 %v174, 112
      %v232 = vpop.permute.xlu0 %231
      %233 = vrot.lane.b32.xlu0 %v175, 112
      %v234 = vpop.permute.xlu0 %233
      %235 = vrot.lane.b32.xlu0 %v176, 112
      %v236 = vpop.permute.xlu0 %235
      %vm237 = vcmask 916480
      %v238 = vsel %vm237, %v226, %v228
      %v239 = vsel %vm237, %v228, %v230
      %v240 = vsel %vm237, %v232, %v234
      %v241 = vsel %vm237, %v234, %v236
      %246 = vrot.lane.b32.xlu0 %v171, 111
      %v247 = vpop.permute.xlu0 %246
      %248 = vrot.lane.b32.xlu0 %v172, 111
      %v249 = vpop.permute.xlu0 %248
      %250 = vrot.lane.b32.xlu0 %v173, 111
      %v251 = vpop.permute.xlu0 %250
      %252 = vrot.lane.b32.xlu0 %v174, 111
      %v253 = vpop.permute.xlu0 %252
      %254 = vrot.lane.b32.xlu0 %v175, 111
      %v255 = vpop.permute.xlu0 %254
      %256 = vrot.lane.b32.xlu0 %v176, 111
      %v257 = vpop.permute.xlu0 %256
      %vm258 = vcmask 908288
      %v259 = vsel %vm258, %v247, %v249
      %v260 = vsel %vm258, %v249, %v251
      %v261 = vsel %vm258, %v253, %v255
      %v262 = vsel %vm258, %v255, %v257
      %267 = vrot.lane.b32.xlu0 %v171, 110
      %v268 = vpop.permute.xlu0 %267
      %269 = vrot.lane.b32.xlu0 %v172, 110
      %v270 = vpop.permute.xlu0 %269
      %271 = vrot.lane.b32.xlu0 %v173, 110
      %v272 = vpop.permute.xlu0 %271
      %273 = vrot.lane.b32.xlu0 %v174, 110
      %v274 = vpop.permute.xlu0 %273
      %275 = vrot.lane.b32.xlu0 %v175, 110
      %v276 = vpop.permute.xlu0 %275
      %277 = vrot.lane.b32.xlu0 %v176, 110
      %v278 = vpop.permute.xlu0 %277
      %vm279 = vcmask 900096
      %v280 = vsel %vm279, %v268, %v270
      %v281 = vsel %vm279, %v270, %v272
      %v282 = vsel %vm279, %v274, %v276
      %v283 = vsel %vm279, %v276, %v278
      %288 = vrot.lane.b32.xlu0 %v171, 96
      %v289 = vpop.permute.xlu0 %288
      %290 = vrot.lane.b32.xlu0 %v172, 96
      %v291 = vpop.permute.xlu0 %290
      %292 = vrot.lane.b32.xlu0 %v173, 96
      %v293 = vpop.permute.xlu0 %292
      %294 = vrot.lane.b32.xlu0 %v174, 96
      %v295 = vpop.permute.xlu0 %294
      %296 = vrot.lane.b32.xlu0 %v175, 96
      %v297 = vpop.permute.xlu0 %296
      %298 = vrot.lane.b32.xlu0 %v176, 96
      %v299 = vpop.permute.xlu0 %298
      %vm300 = vcmask 785408
      %v301 = vsel %vm300, %v289, %v291
      %v302 = vsel %vm300, %v291, %v293
      %v303 = vsel %vm300, %v295, %v297
      %v304 = vsel %vm300, %v297, %v299
      %309 = vrot.lane.b32.xlu0 %v171, 95
      %v310 = vpop.permute.xlu0 %309
      %311 = vrot.lane.b32.xlu0 %v172, 95
      %v312 = vpop.permute.xlu0 %311
      %313 = vrot.lane.b32.xlu0 %v173, 95
      %v314 = vpop.permute.xlu0 %313
      %315 = vrot.lane.b32.xlu0 %v174, 95
      %v316 = vpop.permute.xlu0 %315
      %317 = vrot.lane.b32.xlu0 %v175, 95
      %v318 = vpop.permute.xlu0 %317
      %319 = vrot.lane.b32.xlu0 %v176, 95
      %v320 = vpop.permute.xlu0 %319
      %vm321 = vcmask 777216
      %v322 = vsel %vm321, %v310, %v312
      %v323 = vsel %vm321, %v312, %v314
      %v324 = vsel %vm321, %v316, %v318
      %v325 = vsel %vm321, %v318, %v320
      %330 = vrot.lane.b32.xlu0 %v171, 94
      %v331 = vpop.permute.xlu0 %330
      %332 = vrot.lane.b32.xlu0 %v172, 94
      %v333 = vpop.permute.xlu0 %332
      %334 = vrot.lane.b32.xlu0 %v173, 94
      %v335 = vpop.permute.xlu0 %334
      %336 = vrot.lane.b32.xlu0 %v174, 94
      %v337 = vpop.permute.xlu0 %336
      %338 = vrot.lane.b32.xlu0 %v175, 94
      %v339 = vpop.permute.xlu0 %338
      %340 = vrot.lane.b32.xlu0 %v176, 94
      %v341 = vpop.permute.xlu0 %340
      %vm342 = vcmask 769024
      %v343 = vsel %vm342, %v331, %v333
      %v344 = vsel %vm342, %v333, %v335
      %v345 = vsel %vm342, %v337, %v339
      %v346 = vsel %vm342, %v339, %v341
      %v351 = vld [vmem:[%s1] sm:$0xff]
      %v352 = vld [vmem:[%s1 + $0x8] sm:$0xff]
      %v353 = vld [vmem:[%s2] sm:$0xff]
      %355 = vset.pattern.permute.xlu0 0
      %356 = vperm.xlu0 %355, %v353
      %v357 = vpop.permute.xlu0 %356
      %vm359 = vcmask 130048
      %v361 = vsel %vm359, %v352, 0
      %363 = vmatprep.subr.mxu0 %v172
      %364 = vmatpush1.msra.mxu0 %v171
      %365 = vmatprep.subr.mxu0 %v175
      %366 = vmatpush1.msra.mxu0 %v174
      %367 = vmatprep.subr.mxu0 %v197
      %368 = vmatpush1.msra.mxu0 %v196
      %369 = vmatprep.subr.mxu0 %v199
      %370 = vmatpush1.msra.mxu0 %v198
      %371 = vmatprep.subr.mxu0 %v218
      %372 = vmatpush1.msra.mxu0 %v217
      %373 = vmatprep.subr.mxu0 %v220
      %374 = vmatpush1.msra.mxu0 %v219
      %375 = vmatprep.subr.mxu0 %v239
      %376 = vmatpush1.msra.mxu0 %v238
      %377 = vmatprep.subr.mxu0 %v241
      %378 = vmatpush1.msra.mxu0 %v240
      %379 = vmatprep.subr.mxu0 %v260
      %380 = vmatpush1.msra.mxu0 %v259
      %381 = vmatprep.subr.mxu0 %v262
      %382 = vmatpush1.msra.mxu0 %v261
      %383 = vmatprep.subr.mxu0 %v281
      %384 = vmatpush1.msra.mxu0 %v280
      %385 = vmatprep.subr.mxu0 %v283
      %386 = vmatpush1.msra.mxu0 %v282
      %387 = vmatprep.subr.mxu0 %v302
      %388 = vmatpush1.msra.mxu0 %v301
      %389 = vmatprep.subr.mxu0 %v304
      %390 = vmatpush1.msra.mxu0 %v303
      %391 = vmatprep.subr.mxu0 %v323
      %392 = vmatpush1.msra.mxu0 %v322
      %393 = vmatprep.subr.mxu0 %v325
      %394 = vmatpush1.msra.mxu0 %v324
      %395 = vmatprep.subr.mxu0 %v344
      %396 = vmatpush1.msra.mxu0 %v343
      %397 = vmatprep.subr.mxu0 %v346
      %398 = vmatpush1.msra.mxu0 %v345
      %399 = vmatprep.subr.mxu0 0.0
      %400 = vmatpush1.msra.mxu0 0.0
      %401 = vmatprep.subr.mxu0 0.0
      %402 = vmatpush1.msra.mxu0 0.0
      %403 = vmatprep.subr.mxu0 0.0
      %404 = vmatpush1.msra.mxu0 0.0
      %405 = vmatprep.subr.mxu0 0.0
      %406 = vmatpush1.msra.mxu0 0.0
      %407 = vmatprep.subr.mxu0 0.0
      %408 = vmatpush1.msra.mxu0 0.0
      %409 = vmatprep.subr.mxu0 0.0
      %410 = vmatpush1.msra.mxu0 0.0
      %411 = vmatprep.subr.mxu0 0.0
      %412 = vmatpush1.msra.mxu0 0.0
      %413 = vmatprep.subr.mxu0 0.0
      %414 = vmatpush1.msra.mxu0 0.0
      %415 = vmatprep.subr.mxu0 0.0
      %416 = vmatpush1.msra.mxu0 0.0
      %417 = vmatprep.subr.mxu0 0.0
      %418 = vmatpush1.msra.mxu0 0.0
      %419 = vmatprep.subr.mxu0 0.0
      %420 = vmatpush1.msra.mxu0 0.0
      %421 = vmatprep.subr.mxu0 0.0
      %422 = vmatpush1.msra.mxu0 0.0
      %423 = vmatprep.subr.mxu0 0.0
      %424 = vmatpush1.msra.mxu0 0.0
      %425 = vmatprep.subr.mxu0 0.0
      %426 = vmatpush1.msra.mxu0 0.0
      %427 = vmatprep.mubr.f32.mxu0 %v361
      %428 = vmatmul.mubr.f32.gmra.mrb[0].mxu0 %v351
      %v429 = vpop.f32.mrb[0].mxu0
      %v430 = vadd.f32 %v357, %v429
      %v431 = vpop.f32.mrb[0].mxu0
      %v432 = vadd.f32 %v357, %v431
      %433 = vdwg.mxu0
      %v434 = vmax.f32 %v430, 0.0
      %v435 = vmax.f32 %v432, 0.0
      %436 = vst [vmem:[%s170] sm:$0xff] %v434
      %437 = vst [vmem:[%s170 + $0x8] sm:$0xff] %v435
      %p438 = scmp.lt.s32.totalorder %s14, 1
      %s439 = scalar_select %p438, %s14, 1
      %s440 = smul.addr %s439, 2
      %s441 = smul.addr %s440, 8
      %s442 = scalar_lea.vmem %s3, %s441
      // Predicated region
      $region33: #{dec_mnist_forward.6} parent=31 // pred_check
        %p443 = pneg %p100
      $region34: #{dec_mnist_forward.6} parent=31 // pred_check_branch
        %445 = sbr.rel (%p443) target = $region36
      $region35: #{dec_mnist_forward.6} parent=31 // pred_region
        _
      $region36: #{dec_mnist_forward.6} parent=31 // pred_fallthru
        _
    $region32: #{dec_mnist_forward.6} parent=5 // pred_fallthru
      _
    %p446 = scmp.le.s32.totalorder 2, %s9
    // Predicated region
    $region37: #{dec_mnist_forward.6} parent=5 // pred_check
      %p447 = pneg %p446
    $region38: #{dec_mnist_forward.6} parent=5 // pred_check_branch
      %449 = sbr.rel (%p447) target = $region40
    $region39: #{dec_mnist_forward.6} parent=5 // pred_region
      %s450 = ssub.s32 %s9, 2
      // Predicated region
      $region41: #{dec_mnist_forward.6} parent=39 // pred_check
        %p451 = pneg %p106
      $region42: #{dec_mnist_forward.6} parent=39 // pred_check_branch
        %453 = sbr.rel (%p451) target = $region44
      $region43: #{dec_mnist_forward.6} parent=39 // pred_region
        %p454 = scmp.lt.s32.totalorder %s15, 1
        %s455 = scalar_select %p454, %s15, 1
        %s456 = smul.addr %s455, 2
        %s457 = smul.addr %s456, 8
        %s458 = scalar_lea.vmem %s3, %s457
      $region44: #{dec_mnist_forward.6} parent=39 // pred_fallthru
        _
    $region40: #{dec_mnist_forward.6} parent=5 // pred_fallthru
      _
  $region6: #{dec_mnist_forward.6} parent=0 // loop_footer
    %s13 = sadd.s32 1, %s9
  $region7: #{dec_mnist_forward.6} parent=0 // loop_footer_branch
    %8 = sbr.rel target = $region3
  $region8: #{dec_mnist_forward.6} parent=0 // loop_exit
    _

// kernel: dec_mnist_forward.7
$region0: #{dec_mnist_forward.7}
  #allocation0 [shape = 'u32[]', space=smem, size = 0x4, offset = 0x4, fixed_abs, tag = 'smem constant byte address 0x4 - core index']
  #allocation1 [shape = 'u32[144,128]{1,0:T(1,128)}', space=vmem, size = 0x12000, scoped, tag = 'internal scratch']
  %s0 = inlined_call_operand.vmem [shape: f32[2,8,1024], index: 0, kind: input, shape index: {}]
  %s1 = inlined_call_operand.vmem [shape: f32[8,72], index: 1, kind: input, shape index: {}]
  %s2 = inlined_call_operand.vmem [shape: f32[8,1], index: 2, kind: input, shape index: {}]
  %s3 = inlined_call_operand.vmem [shape: f32[2,8,896], index: 3, kind: output, shape index: {}]
  %s4 = sld [smem:[#allocation0]]
  $region45: #{dec_mnist_forward.7} parent=0
    _
  %s6 = ssub.s32 1, %s4
  %s7 = scalar_select 0, %s6, %s4
  loop: start=0, step=1, limit=4
  $region2: #{dec_mnist_forward.7} parent=0 // loop_pre_header
    _
  $region3: #{dec_mnist_forward.7} parent=0 // loop_header
    %s9 = sphi 0, %s13
    %p10 = scmp.ge.s32.totalorder %s9, 4
    %s19 = sphi 0, %s21
    %s22 = sphi 0, %s19
    %s23 = sphi 0, %s22
    %s39 = sphi 0, %s23
    %s43 = sphi 0, %s43
    %s45 = sphi 0, %s43
    %s46 = sphi 0, %s45
    %s60 = sphi 0, %s46
    %s64 = sphi 0, %s64
    %s66 = sphi 0, %s64
    %s67 = sphi 0, %s66
    %s81 = sphi 0, %s67
    %s87 = sphi 0, %s89
    %s90 = sphi 0, %s87
    %s91 = sphi 0, %s90
    %s107 = sphi 0, %s91
  $region4: #{dec_mnist_forward.7} parent=0 // loop_header_branch
    %12 = sbr.rel (%p10) target = $region8
  $region5: #{dec_mnist_forward.7} parent=0 // loop_body
    %s14 = ssub.s32 %s9, 1
    %s15 = ssub.s32 %s9, 2
    %s16 = sadd.s32 %s9, 1
    %s17 = ssub.s32 %s9, %s16
    %p18 = scmp.eq.s32.totalorder %s17, 0
    %s20 = sadd.s32 %s19, 1
    %s21 = scalar_select %p18, %s19, %s20
    %p24 = pneg %p18
    %p25 = scmp.eq.s32.totalorder %s9, 1
    %p26 = por %p24, %p25
    %p27 = scmp.ne.s32.totalorder %s19, %s22
    %p28 = scmp.eq.s32.totalorder %s9, 0
    %p29 = por %p27, %p28
    %p30 = scmp.ne.s32.totalorder %s19, %s22
    %p31 = scmp.eq.s32.totalorder %s14, 1
    %p32 = por %p30, %p31
    %p33 = scmp.ne.s32.totalorder %s22, %s23
    %p34 = scmp.eq.s32.totalorder %s14, 0
    %p35 = por %p33, %p34
    %p36 = scmp.ne.s32.totalorder %s22, %s23
    %p37 = scmp.eq.s32.totalorder %s15, 1
    %p38 = por %p36, %p37
    %p40 = scmp.ne.s32.totalorder %s23, %s39
    %p41 = scmp.eq.s32.totalorder %s15, 0
    %p42 = por %p40, %p41
    %s44 = sadd.s32 %s43, 1
    %p47 = scmp.eq.s32.totalorder %s9, 1
    %p48 = scmp.ne.s32.totalorder %s43, %s45
    %p49 = scmp.eq.s32.totalorder %s9, 0
    %p50 = por %p48, %p49
    %p51 = scmp.ne.s32.totalorder %s43, %s45
    %p52 = scmp.eq.s32.totalorder %s14, 1
    %p53 = por %p51, %p52
    %p54 = scmp.ne.s32.totalorder %s45, %s46
    %p55 = scmp.eq.s32.totalorder %s14, 0
    %p56 = por %p54, %p55
    %p57 = scmp.ne.s32.totalorder %s45, %s46
    %p58 = scmp.eq.s32.totalorder %s15, 1
    %p59 = por %p57, %p58
    %p61 = scmp.ne.s32.totalorder %s46, %s60
    %p62 = scmp.eq.s32.totalorder %s15, 0
    %p63 = por %p61, %p62
    %s65 = sadd.s32 %s64, 1
    %p68 = scmp.eq.s32.totalorder %s9, 1
    %p69 = scmp.ne.s32.totalorder %s64, %s66
    %p70 = scmp.eq.s32.totalorder %s9, 0
    %p71 = por %p69, %p70
    %p72 = scmp.ne.s32.totalorder %s64, %s66
    %p73 = scmp.eq.s32.totalorder %s14, 1
    %p74 = por %p72, %p73
    %p75 = scmp.ne.s32.totalorder %s66, %s67
    %p76 = scmp.eq.s32.totalorder %s14, 0
    %p77 = por %p75, %p76
    %p78 = scmp.ne.s32.totalorder %s66, %s67
    %p79 = scmp.eq.s32.totalorder %s15, 1
    %p80 = por %p78, %p79
    %p82 = scmp.ne.s32.totalorder %s67, %s81
    %p83 = scmp.eq.s32.totalorder %s15, 0
    %p84 = por %p82, %p83
    %s85 = ssub.s32 %s9, %s16
    %p86 = scmp.eq.s32.totalorder %s85, 0
    %s88 = sadd.s32 %s87, 1
    %s89 = scalar_select %p86, %s87, %s88
    %p92 = pneg %p86
    %p93 = scmp.eq.s32.totalorder %s9, 1
    %p94 = por %p92, %p93
    %p95 = scmp.ne.s32.totalorder %s87, %s90
    %p96 = scmp.eq.s32.totalorder %s9, 0
    %p97 = por %p95, %p96
    %p98 = scmp.ne.s32.totalorder %s87, %s90
    %p99 = scmp.eq.s32.totalorder %s14, 1
    %p100 = por %p98, %p99
    %p101 = scmp.ne.s32.totalorder %s90, %s91
    %p102 = scmp.eq.s32.totalorder %s14, 0
    %p103 = por %p101, %p102
    %p104 = scmp.ne.s32.totalorder %s90, %s91
    %p105 = scmp.eq.s32.totalorder %s15, 1
    %p106 = por %p104, %p105
    %p108 = scmp.ne.s32.totalorder %s91, %s107
    %p109 = scmp.eq.s32.totalorder %s15, 0
    %p110 = por %p108, %p109
    %p111 = scmp.le.s32.totalorder 1, %s9
    %p112 = scmp.lt.s32.totalorder %s9, 3
    %p113 = pnand %p111, %p112
    %p114 = pneg %p113
    // Predicated region
    $region9: #{dec_mnist_forward.7} parent=5 // pred_check
      _
    $region10: #{dec_mnist_forward.7} parent=5 // pred_check_branch
      %116 = sbr.rel (%p113) target = $region12
    $region11: #{dec_mnist_forward.7} parent=5 // pred_region
      %s117 = ssub.s32 %s9, 1
      // Predicated region
      $region13: #{dec_mnist_forward.7} parent=11 // pred_check
        %p118 = pneg %p56
      $region14: #{dec_mnist_forward.7} parent=11 // pred_check_branch
        %120 = sbr.rel (%p118) target = $region16
      $region15: #{dec_mnist_forward.7} parent=11 // pred_region
        _
      $region16: #{dec_mnist_forward.7} parent=11 // pred_fallthru
        _
      // Predicated region
      $region17: #{dec_mnist_forward.7} parent=11 // pred_check
        %p121 = pneg %p77
      $region18: #{dec_mnist_forward.7} parent=11 // pred_check_branch
        %123 = sbr.rel (%p121) target = $region20
      $region19: #{dec_mnist_forward.7} parent=11 // pred_region
        _
      $region20: #{dec_mnist_forward.7} parent=11 // pred_fallthru
        _
    $region12: #{dec_mnist_forward.7} parent=5 // pred_fallthru
      _
    %p124 = scmp.lt.s32.totalorder %s9, 2
    // Predicated region
    $region21: #{dec_mnist_forward.7} parent=5 // pred_check
      %p125 = pneg %p124
    $region22: #{dec_mnist_forward.7} parent=5 // pred_check_branch
      %127 = sbr.rel (%p125) target = $region24
    $region23: #{dec_mnist_forward.7} parent=5 // pred_region
      // Predicated region
      $region25: #{dec_mnist_forward.7} parent=23 // pred_check
        %p128 = pneg %p29
      $region26: #{dec_mnist_forward.7} parent=23 // pred_check_branch
        %130 = sbr.rel (%p128) target = $region28
      $region27: #{dec_mnist_forward.7} parent=23 // pred_region
        %p131 = scmp.lt.s32.totalorder %s9, 1
        %s132 = scalar_select %p131, %s9, 1
        %s133 = smul.addr %s132, 8
        %s134 = smul.addr %s133, 8
        %s135 = scalar_lea.vmem %s0, %s134
      $region28: #{dec_mnist_forward.7} parent=23 // pred_fallthru
        _
    $region24: #{dec_mnist_forward.7} parent=5 // pred_fallthru
      _
    %p136 = scmp.le.s32.totalorder 1, %s9
    %p137 = scmp.lt.s32.totalorder %s9, 3
    %p138 = pnand %p136, %p137
    %p139 = pneg %p138
    // Predicated region
    $region29: #{dec_mnist_forward.7} parent=5 // pred_check
      _
    $region30: #{dec_mnist_forward.7} parent=5 // pred_check_branch
      %141 = sbr.rel (%p138) target = $region32
    $region31: #{dec_mnist_forward.7} parent=5 // pred_region
      %s142 = ssub.s32 %s9, 1
      %p143 = scmp.lt.s32.totalorder %s14, 1
      %s144 = scalar_select %p143, %s14, 1
      %s145 = smul.addr %s144, 8
      %s146 = smul.addr %s145, 8
      %s147 = scalar_lea.vmem %s0, %s146
      %p148 = pneg %p35
      %p149 = pneg %p32
      %p150 = pneg %p56
      %p151 = pneg %p53
      %p152 = pneg %p77
      %p153 = pneg %p74
      %p154 = pneg %p103
      %p155 = pneg %p100
      %p156 = scmp.lt.s32.totalorder %s14, 1
      %s157 = scalar_select %p156, %s14, 1
      %s158 = smul.addr %s157, 7
      %s159 = smul.addr %s158, 8
      %s160 = scalar_lea.vmem %s3, %s159
      %p161 = scmp.lt.s32.totalorder %s14, 1
      %s162 = scalar_select %p161, %s14, 1
      %s163 = smul.addr %s162, 8
      %s164 = smul.addr %s163, 8
      %s165 = scalar_lea.vmem %s0, %s164
      %p166 = scmp.lt.s32.totalorder %s14, 1
      %s167 = scalar_select %p166, %s14, 1
      %s168 = smul.addr %s167, 7
      %s169 = smul.addr %s168, 8
      %s170 = scalar_lea.vmem %s3, %s169
      %v171 = vld [vmem:[%s165] sm:$0xff]
      %v172 = vld [vmem:[%s165 + $0x8] sm:$0xff]
      %v173 = vld [vmem:[%s165 + $0x10] sm:$0xff]
      %v174 = vld [vmem:[%s165 + $0x18] sm:$0xff]
      %v175 = vld [vmem:[%s165 + $0x20] sm:$0xff]
      %v176 = vld [vmem:[%s165 + $0x28] sm:$0xff]
      %v177 = vld [vmem:[%s165 + $0x30] sm:$0xff]
      %v178 = vld [vmem:[%s165 + $0x38] sm:$0xff]
      %187 = vrot.lane.b32.xlu0 %v171, 127
      %v188 = vpop.permute.xlu0 %187
      %189 = vrot.lane.b32.xlu0 %v172, 127
      %v190 = vpop.permute.xlu0 %189
      %191 = vrot.lane.b32.xlu0 %v173, 127
      %v192 = vpop.permute.xlu0 %191
      %193 = vrot.lane.b32.xlu0 %v174, 127
      %v194 = vpop.permute.xlu0 %193
      %195 = vrot.lane.b32.xlu0 %v175, 127
      %v196 = vpop.permute.xlu0 %195
      %197 = vrot.lane.b32.xlu0 %v176, 127
      %v198 = vpop.permute.xlu0 %197
      %199 = vrot.lane.b32.xlu0 %v177, 127
      %v200 = vpop.permute.xlu0 %199
      %201 = vrot.lane.b32.xlu0 %v178, 127
      %v202 = vpop.permute.xlu0 %201
      %vm203 = vcmask 1039360
      %v204 = vsel %vm203, %v188, %v190
      %v205 = vsel %vm203, %v190, %v192
      %v206 = vsel %vm203, %v192, %v194
      %v207 = vsel %vm203, %v194, %v196
      %v208 = vsel %vm203, %v196, %v198
      %v209 = vsel %vm203, %v198, %v200
      %v210 = vsel %vm203, %v200, %v202
      %218 = vrot.lane.b32.xlu0 %v171, 126
      %v219 = vpop.permute.xlu0 %218
      %220 = vrot.lane.b32.xlu0 %v172, 126
      %v221 = vpop.permute.xlu0 %220
      %222 = vrot.lane.b32.xlu0 %v173, 126
      %v223 = vpop.permute.xlu0 %222
      %224 = vrot.lane.b32.xlu0 %v174, 126
      %v225 = vpop.permute.xlu0 %224
      %226 = vrot.lane.b32.xlu0 %v175, 126
      %v227 = vpop.permute.xlu0 %226
      %228 = vrot.lane.b32.xlu0 %v176, 126
      %v229 = vpop.permute.xlu0 %228
      %230 = vrot.lane.b32.xlu0 %v177, 126
      %v231 = vpop.permute.xlu0 %230
      %232 = vrot.lane.b32.xlu0 %v178, 126
      %v233 = vpop.permute.xlu0 %232
      %vm234 = vcmask 1031168
      %v235 = vsel %vm234, %v219, %v221
      %v236 = vsel %vm234, %v221, %v223
      %v237 = vsel %vm234, %v223, %v225
      %v238 = vsel %vm234, %v225, %v227
      %v239 = vsel %vm234, %v227, %v229
      %v240 = vsel %vm234, %v229, %v231
      %v241 = vsel %vm234, %v231, %v233
      %249 = vrot.lane.b32.xlu0 %v171, 98
      %v250 = vpop.permute.xlu0 %249
      %251 = vrot.lane.b32.xlu0 %v172, 98
      %v252 = vpop.permute.xlu0 %251
      %253 = vrot.lane.b32.xlu0 %v173, 98
      %v254 = vpop.permute.xlu0 %253
      %255 = vrot.lane.b32.xlu0 %v174, 98
      %v256 = vpop.permute.xlu0 %255
      %257 = vrot.lane.b32.xlu0 %v175, 98
      %v258 = vpop.permute.xlu0 %257
      %259 = vrot.lane.b32.xlu0 %v176, 98
      %v260 = vpop.permute.xlu0 %259
      %261 = vrot.lane.b32.xlu0 %v177, 98
      %v262 = vpop.permute.xlu0 %261
      %263 = vrot.lane.b32.xlu0 %v178, 98
      %v264 = vpop.permute.xlu0 %263
      %vm265 = vcmask 801792
      %v266 = vsel %vm265, %v250, %v252
      %v267 = vsel %vm265, %v252, %v254
      %v268 = vsel %vm265, %v254, %v256
      %v269 = vsel %vm265, %v256, %v258
      %v270 = vsel %vm265, %v258, %v260
      %v271 = vsel %vm265, %v260, %v262
      %v272 = vsel %vm265, %v262, %v264
      %280 = vrot.lane.b32.xlu0 %v171, 97
      %v281 = vpop.permute.xlu0 %280
      %282 = vrot.lane.b32.xlu0 %v172, 97
      %v283 = vpop.permute.xlu0 %282
      %284 = vrot.lane.b32.xlu0 %v173, 97
      %v285 = vpop.permute.xlu0 %284
      %286 = vrot.lane.b32.xlu0 %v174, 97
      %v287 = vpop.permute.xlu0 %286
      %288 = vrot.lane.b32.xlu0 %v175, 97
      %v289 = vpop.permute.xlu0 %288
      %290 = vrot.lane.b32.xlu0 %v176, 97
      %v291 = vpop.permute.xlu0 %290
      %292 = vrot.lane.b32.xlu0 %v177, 97
      %v293 = vpop.permute.xlu0 %292
      %294 = vrot.lane.b32.xlu0 %v178, 97
      %v295 = vpop.permute.xlu0 %294
      %vm296 = vcmask 793600
      %v297 = vsel %vm296, %v281, %v283
      %v298 = vsel %vm296, %v283, %v285
      %v299 = vsel %vm296, %v285, %v287
      %v300 = vsel %vm296, %v287, %v289
      %v301 = vsel %vm296, %v289, %v291
      %v302 = vsel %vm296, %v291, %v293
      %v303 = vsel %vm296, %v293, %v295
      %311 = vrot.lane.b32.xlu0 %v171, 96
      %v312 = vpop.permute.xlu0 %311
      %313 = vrot.lane.b32.xlu0 %v172, 96
      %v314 = vpop.permute.xlu0 %313
      %315 = vrot.lane.b32.xlu0 %v173, 96
      %v316 = vpop.permute.xlu0 %315
      %317 = vrot.lane.b32.xlu0 %v174, 96
      %v318 = vpop.permute.xlu0 %317
      %319 = vrot.lane.b32.xlu0 %v175, 96
      %v320 = vpop.permute.xlu0 %319
      %321 = vrot.lane.b32.xlu0 %v176, 96
      %v322 = vpop.permute.xlu0 %321
      %323 = vrot.lane.b32.xlu0 %v177, 96
      %v324 = vpop.permute.xlu0 %323
      %325 = vrot.lane.b32.xlu0 %v178, 96
      %v326 = vpop.permute.xlu0 %325
      %vm327 = vcmask 785408
      %v328 = vsel %vm327, %v312, %v314
      %v329 = vsel %vm327, %v314, %v316
      %v330 = vsel %vm327, %v316, %v318
      %v331 = vsel %vm327, %v318, %v320
      %v332 = vsel %vm327, %v320, %v322
      %v333 = vsel %vm327, %v322, %v324
      %v334 = vsel %vm327, %v324, %v326
      %342 = vrot.lane.b32.xlu0 %v171, 68
      %v343 = vpop.permute.xlu0 %342
      %344 = vrot.lane.b32.xlu0 %v172, 68
      %v345 = vpop.permute.xlu0 %344
      %346 = vrot.lane.b32.xlu0 %v173, 68
      %v347 = vpop.permute.xlu0 %346
      %348 = vrot.lane.b32.xlu0 %v174, 68
      %v349 = vpop.permute.xlu0 %348
      %350 = vrot.lane.b32.xlu0 %v175, 68
      %v351 = vpop.permute.xlu0 %350
      %352 = vrot.lane.b32.xlu0 %v176, 68
      %v353 = vpop.permute.xlu0 %352
      %354 = vrot.lane.b32.xlu0 %v177, 68
      %v355 = vpop.permute.xlu0 %354
      %356 = vrot.lane.b32.xlu0 %v178, 68
      %v357 = vpop.permute.xlu0 %356
      %vm358 = vcmask 556032
      %v359 = vsel %vm358, %v343, %v345
      %v360 = vsel %vm358, %v345, %v347
      %v361 = vsel %vm358, %v347, %v349
      %v362 = vsel %vm358, %v349, %v351
      %v363 = vsel %vm358, %v351, %v353
      %v364 = vsel %vm358, %v353, %v355
      %v365 = vsel %vm358, %v355, %v357
      %373 = vrot.lane.b32.xlu0 %v171, 67
      %v374 = vpop.permute.xlu0 %373
      %375 = vrot.lane.b32.xlu0 %v172, 67
      %v376 = vpop.permute.xlu0 %375
      %377 = vrot.lane.b32.xlu0 %v173, 67
      %v378 = vpop.permute.xlu0 %377
      %379 = vrot.lane.b32.xlu0 %v174, 67
      %v380 = vpop.permute.xlu0 %379
      %381 = vrot.lane.b32.xlu0 %v175, 67
      %v382 = vpop.permute.xlu0 %381
      %383 = vrot.lane.b32.xlu0 %v176, 67
      %v384 = vpop.permute.xlu0 %383
      %385 = vrot.lane.b32.xlu0 %v177, 67
      %v386 = vpop.permute.xlu0 %385
      %387 = vrot.lane.b32.xlu0 %v178, 67
      %v388 = vpop.permute.xlu0 %387
      %vm389 = vcmask 547840
      %v390 = vsel %vm389, %v374, %v376
      %v391 = vsel %vm389, %v376, %v378
      %v392 = vsel %vm389, %v378, %v380
      %v393 = vsel %vm389, %v380, %v382
      %v394 = vsel %vm389, %v382, %v384
      %v395 = vsel %vm389, %v384, %v386
      %v396 = vsel %vm389, %v386, %v388
      %404 = vrot.lane.b32.xlu0 %v171, 66
      %v405 = vpop.permute.xlu0 %404
      %406 = vrot.lane.b32.xlu0 %v172, 66
      %v407 = vpop.permute.xlu0 %406
      %408 = vrot.lane.b32.xlu0 %v173, 66
      %v409 = vpop.permute.xlu0 %408
      %410 = vrot.lane.b32.xlu0 %v174, 66
      %v411 = vpop.permute.xlu0 %410
      %412 = vrot.lane.b32.xlu0 %v175, 66
      %v413 = vpop.permute.xlu0 %412
      %414 = vrot.lane.b32.xlu0 %v176, 66
      %v415 = vpop.permute.xlu0 %414
      %416 = vrot.lane.b32.xlu0 %v177, 66
      %v417 = vpop.permute.xlu0 %416
      %418 = vrot.lane.b32.xlu0 %v178, 66
      %v419 = vpop.permute.xlu0 %418
      %vm420 = vcmask 539648
      %v421 = vsel %vm420, %v405, %v407
      %v422 = vsel %vm420, %v407, %v409
      %v423 = vsel %vm420, %v409, %v411
      %v424 = vsel %vm420, %v411, %v413
      %v425 = vsel %vm420, %v413, %v415
      %v426 = vsel %vm420, %v415, %v417
      %v427 = vsel %vm420, %v417, %v419
      %v435 = vld [vmem:[%s1] sm:$0xff]
      %v436 = vld [vmem:[%s2] sm:$0xff]
      %438 = vset.pattern.permute.xlu0 0
      %439 = vperm.xlu0 %438, %v436
      %v440 = vpop.permute.xlu0 %439
      %vm442 = vcmask 588800
      %v444 = vsel %vm442, %v435, 0
      %446 = vmatprep.subr.mxu0 %v172
      %447 = vmatpush1.msra.mxu0 %v171
      %448 = vmatprep.subr.mxu0 %v205
      %449 = vmatpush1.msra.mxu0 %v204
      %450 = vmatprep.subr.mxu0 %v236
      %451 = vmatpush1.msra.mxu0 %v235
      %452 = vmatprep.subr.mxu0 %v267
      %453 = vmatpush1.msra.mxu0 %v266
      %454 = vmatprep.subr.mxu0 %v298
      %455 = vmatpush1.msra.mxu0 %v297
      %456 = vmatprep.subr.mxu0 %v329
      %457 = vmatpush1.msra.mxu0 %v328
      %458 = vmatprep.subr.mxu0 %v360
      %459 = vmatpush1.msra.mxu0 %v359
      %460 = vmatprep.subr.mxu0 %v391
      %461 = vmatpush1.msra.mxu0 %v390
      %462 = vmatprep.subr.mxu0 %v422
      %463 = vmatpush1.msra.mxu0 %v421
      %464 = vmatprep.subr.mxu0 0.0
      %465 = vmatpush1.msra.mxu0 0.0
      %466 = vmatprep.subr.mxu0 0.0
      %467 = vmatpush1.msra.mxu0 0.0
      %468 = vmatprep.subr.mxu0 0.0
      %469 = vmatpush1.msra.mxu0 0.0
      %470 = vmatprep.subr.mxu0 0.0
      %471 = vmatpush1.msra.mxu0 0.0
      %472 = vmatprep.subr.mxu0 0.0
      %473 = vmatpush1.msra.mxu0 0.0
      %474 = vmatprep.subr.mxu0 0.0
      %475 = vmatpush1.msra.mxu0 0.0
      %476 = vmatprep.subr.mxu0 0.0
      %477 = vmatpush1.msra.mxu0 0.0
      %478 = vmatprep.subr.mxu0 0.0
      %479 = vmatpush1.msra.mxu0 0.0
      %480 = vmatprep.subr.mxu0 0.0
      %481 = vmatpush1.msra.mxu0 0.0
      %482 = vmatprep.subr.mxu0 0.0
      %483 = vmatpush1.msra.mxu0 0.0
      %484 = vmatprep.subr.mxu0 0.0
      %485 = vmatpush1.msra.mxu0 0.0
      %486 = vmatprep.subr.mxu0 0.0
      %487 = vmatpush1.msra.mxu0 0.0
      %488 = vmatprep.subr.mxu0 0.0
      %489 = vmatpush1.msra.mxu0 0.0
      %490 = vmatprep.subr.mxu0 0.0
      %491 = vmatpush1.msra.mxu0 0.0
      %492 = vmatprep.subr.mxu0 0.0
      %493 = vmatpush1.msra.mxu0 0.0
      %494 = vmatprep.subr.mxu0 0.0
      %495 = vmatpush1.msra.mxu0 0.0
      %496 = vmatprep.subr.mxu0 0.0
      %497 = vmatpush1.msra.mxu0 0.0
      %498 = vmatprep.subr.mxu0 0.0
      %499 = vmatpush1.msra.mxu0 0.0
      %500 = vmatprep.subr.mxu0 0.0
      %501 = vmatpush1.msra.mxu0 0.0
      %502 = vmatprep.subr.mxu0 0.0
      %503 = vmatpush1.msra.mxu0 0.0
      %504 = vmatprep.subr.mxu0 0.0
      %505 = vmatpush1.msra.mxu0 0.0
      %506 = vmatprep.subr.mxu0 0.0
      %507 = vmatpush1.msra.mxu0 0.0
      %508 = vmatprep.subr.mxu0 0.0
      %509 = vmatpush1.msra.mxu0 0.0
      %510 = vmatprep.mubr.f32.mxu0 0.0
      %511 = vmatmul.mubr.f32.gmra.mrb[0].mxu0 %v444
      %v512 = vpop.f32.mrb[0].mxu0
      %v513 = vadd.f32 %v440, %v512
      %v514 = vpop.f32.mrb[0].mxu0
      %v515 = vadd.f32 %v440, %v514
      %516 = vdwg.mxu0
      %517 = vmatprep.subr.mxu0 %v174
      %518 = vmatpush1.msra.mxu0 %v173
      %519 = vmatprep.subr.mxu0 %v207
      %520 = vmatpush1.msra.mxu0 %v206
      %521 = vmatprep.subr.mxu0 %v238
      %522 = vmatpush1.msra.mxu0 %v237
      %523 = vmatprep.subr.mxu0 %v269
      %524 = vmatpush1.msra.mxu0 %v268
      %525 = vmatprep.subr.mxu0 %v300
      %526 = vmatpush1.msra.mxu0 %v299
      %527 = vmatprep.subr.mxu0 %v331
      %528 = vmatpush1.msra.mxu0 %v330
      %529 = vmatprep.subr.mxu0 %v362
      %530 = vmatpush1.msra.mxu0 %v361
      %531 = vmatprep.subr.mxu0 %v393
      %532 = vmatpush1.msra.mxu0 %v392
      %533 = vmatprep.subr.mxu0 %v424
      %534 = vmatpush1.msra.mxu0 %v423
      %535 = vmatprep.subr.mxu0 0.0
      %536 = vmatpush1.msra.mxu0 0.0
      %537 = vmatprep.subr.mxu0 0.0
      %538 = vmatpush1.msra.mxu0 0.0
      %539 = vmatprep.subr.mxu0 0.0
      %540 = vmatpush1.msra.mxu0 0.0
      %541 = vmatprep.subr.mxu0 0.0
      %542 = vmatpush1.msra.mxu0 0.0
      %543 = vmatprep.subr.mxu0 0.0
      %544 = vmatpush1.msra.mxu0 0.0
      %545 = vmatprep.subr.mxu0 0.0
      %546 = vmatpush1.msra.mxu0 0.0
      %547 = vmatprep.subr.mxu0 0.0
      %548 = vmatpush1.msra.mxu0 0.0
      %549 = vmatprep.subr.mxu0 0.0
      %550 = vmatpush1.msra.mxu0 0.0
      %551 = vmatprep.subr.mxu0 0.0
      %552 = vmatpush1.msra.mxu0 0.0
      %553 = vmatprep.subr.mxu0 0.0
      %554 = vmatpush1.msra.mxu0 0.0
      %555 = vmatprep.subr.mxu0 0.0
      %556 = vmatpush1.msra.mxu0 0.0
      %557 = vmatprep.subr.mxu0 0.0
      %558 = vmatpush1.msra.mxu0 0.0
      %559 = vmatprep.subr.mxu0 0.0
      %560 = vmatpush1.msra.mxu0 0.0
      %561 = vmatprep.subr.mxu0 0.0
      %562 = vmatpush1.msra.mxu0 0.0
      %563 = vmatprep.subr.mxu0 0.0
      %564 = vmatpush1.msra.mxu0 0.0
      %565 = vmatprep.subr.mxu0 0.0
      %566 = vmatpush1.msra.mxu0 0.0
      %567 = vmatprep.subr.mxu0 0.0
      %568 = vmatpush1.msra.mxu0 0.0
      %569 = vmatprep.subr.mxu0 0.0
      %570 = vmatpush1.msra.mxu0 0.0
      %571 = vmatprep.subr.mxu0 0.0
      %572 = vmatpush1.msra.mxu0 0.0
      %573 = vmatprep.subr.mxu0 0.0
      %574 = vmatpush1.msra.mxu0 0.0
      %575 = vmatprep.subr.mxu0 0.0
      %576 = vmatpush1.msra.mxu0 0.0
      %577 = vmatprep.subr.mxu0 0.0
      %578 = vmatpush1.msra.mxu0 0.0
      %579 = vmatprep.subr.mxu0 0.0
      %580 = vmatpush1.msra.mxu0 0.0
      %581 = vmatprep.mubr.f32.mxu0 0.0
      %582 = vmatmul.mubr.f32.gmra.mrb[0].mxu0 %v444
      %v583 = vpop.f32.mrb[0].mxu0
      %v584 = vadd.f32 %v440, %v583
      %v585 = vpop.f32.mrb[0].mxu0
      %v586 = vadd.f32 %v440, %v585
      %587 = vdwg.mxu0
      %588 = vmatprep.subr.mxu0 %v176
      %589 = vmatpush1.msra.mxu0 %v175
      %590 = vmatprep.subr.mxu0 %v209
      %591 = vmatpush1.msra.mxu0 %v208
      %592 = vmatprep.subr.mxu0 %v240
      %593 = vmatpush1.msra.mxu0 %v239
      %594 = vmatprep.subr.mxu0 %v271
      %595 = vmatpush1.msra.mxu0 %v270
      %596 = vmatprep.subr.mxu0 %v302
      %597 = vmatpush1.msra.mxu0 %v301
      %598 = vmatprep.subr.mxu0 %v333
      %599 = vmatpush1.msra.mxu0 %v332
      %600 = vmatprep.subr.mxu0 %v364
      %601 = vmatpush1.msra.mxu0 %v363
      %602 = vmatprep.subr.mxu0 %v395
      %603 = vmatpush1.msra.mxu0 %v394
      %604 = vmatprep.subr.mxu0 %v426
      %605 = vmatpush1.msra.mxu0 %v425
      %606 = vmatprep.subr.mxu0 0.0
      %607 = vmatpush1.msra.mxu0 0.0
      %608 = vmatprep.subr.mxu0 0.0
      %609 = vmatpush1.msra.mxu0 0.0
      %610 = vmatprep.subr.mxu0 0.0
      %611 = vmatpush1.msra.mxu0 0.0
      %612 = vmatprep.subr.mxu0 0.0
      %613 = vmatpush1.msra.mxu0 0.0
      %614 = vmatprep.subr.mxu0 0.0
      %615 = vmatpush1.msra.mxu0 0.0
      %616 = vmatprep.subr.mxu0 0.0
      %617 = vmatpush1.msra.mxu0 0.0
      %618 = vmatprep.subr.mxu0 0.0
      %619 = vmatpush1.msra.mxu0 0.0
      %620 = vmatprep.subr.mxu0 0.0
      %621 = vmatpush1.msra.mxu0 0.0
      %622 = vmatprep.subr.mxu0 0.0
      %623 = vmatpush1.msra.mxu0 0.0
      %624 = vmatprep.subr.mxu0 0.0
      %625 = vmatpush1.msra.mxu0 0.0
      %626 = vmatprep.subr.mxu0 0.0
      %627 = vmatpush1.msra.mxu0 0.0
      %628 = vmatprep.subr.mxu0 0.0
      %629 = vmatpush1.msra.mxu0 0.0
      %630 = vmatprep.subr.mxu0 0.0
      %631 = vmatpush1.msra.mxu0 0.0
      %632 = vmatprep.subr.mxu0 0.0
      %633 = vmatpush1.msra.mxu0 0.0
      %634 = vmatprep.subr.mxu0 0.0
      %635 = vmatpush1.msra.mxu0 0.0
      %636 = vmatprep.subr.mxu0 0.0
      %637 = vmatpush1.msra.mxu0 0.0
      %638 = vmatprep.subr.mxu0 0.0
      %639 = vmatpush1.msra.mxu0 0.0
      %640 = vmatprep.subr.mxu0 0.0
      %641 = vmatpush1.msra.mxu0 0.0
      %642 = vmatprep.subr.mxu0 0.0
      %643 = vmatpush1.msra.mxu0 0.0
      %644 = vmatprep.subr.mxu0 0.0
      %645 = vmatpush1.msra.mxu0 0.0
      %646 = vmatprep.subr.mxu0 0.0
      %647 = vmatpush1.msra.mxu0 0.0
      %648 = vmatprep.subr.mxu0 0.0
      %649 = vmatpush1.msra.mxu0 0.0
      %650 = vmatprep.subr.mxu0 0.0
      %651 = vmatpush1.msra.mxu0 0.0
      %652 = vmatprep.mubr.f32.mxu0 0.0
      %653 = vmatmul.mubr.f32.gmra.mrb[0].mxu0 %v444
      %v654 = vpop.f32.mrb[0].mxu0
      %v655 = vadd.f32 %v440, %v654
      %v656 = vpop.f32.mrb[0].mxu0
      %v657 = vadd.f32 %v440, %v656
      %658 = vdwg.mxu0
      %659 = vmatprep.subr.mxu0 0.0
      %660 = vmatpush1.msra.mxu0 %v177
      %661 = vmatprep.subr.mxu0 0.0
      %662 = vmatpush1.msra.mxu0 %v210
      %663 = vmatprep.subr.mxu0 0.0
      %664 = vmatpush1.msra.mxu0 %v241
      %665 = vmatprep.subr.mxu0 0.0
      %666 = vmatpush1.msra.mxu0 %v272
      %667 = vmatprep.subr.mxu0 0.0
      %668 = vmatpush1.msra.mxu0 %v303
      %669 = vmatprep.subr.mxu0 0.0
      %670 = vmatpush1.msra.mxu0 %v334
      %671 = vmatprep.subr.mxu0 0.0
      %672 = vmatpush1.msra.mxu0 %v365
      %673 = vmatprep.subr.mxu0 0.0
      %674 = vmatpush1.msra.mxu0 %v396
      %675 = vmatprep.subr.mxu0 0.0
      %676 = vmatpush1.msra.mxu0 %v427
      %677 = vmatprep.subr.mxu0 0.0
      %678 = vmatpush1.msra.mxu0 0.0
      %679 = vmatprep.subr.mxu0 0.0
      %680 = vmatpush1.msra.mxu0 0.0
      %681 = vmatprep.subr.mxu0 0.0
      %682 = vmatpush1.msra.mxu0 0.0
      %683 = vmatprep.subr.mxu0 0.0
      %684 = vmatpush1.msra.mxu0 0.0
      %685 = vmatprep.subr.mxu0 0.0
      %686 = vmatpush1.msra.mxu0 0.0
      %687 = vmatprep.subr.mxu0 0.0
      %688 = vmatpush1.msra.mxu0 0.0
      %689 = vmatprep.subr.mxu0 0.0
      %690 = vmatpush1.msra.mxu0 0.0
      %691 = vmatprep.subr.mxu0 0.0
      %692 = vmatpush1.msra.mxu0 0.0
      %693 = vmatprep.subr.mxu0 0.0
      %694 = vmatpush1.msra.mxu0 0.0
      %695 = vmatprep.subr.mxu0 0.0
      %696 = vmatpush1.msra.mxu0 0.0
      %697 = vmatprep.subr.mxu0 0.0
      %698 = vmatpush1.msra.mxu0 0.0
      %699 = vmatprep.subr.mxu0 0.0
      %700 = vmatpush1.msra.mxu0 0.0
      %701 = vmatprep.subr.mxu0 0.0
      %702 = vmatpush1.msra.mxu0 0.0
      %703 = vmatprep.subr.mxu0 0.0
      %704 = vmatpush1.msra.mxu0 0.0
      %705 = vmatprep.subr.mxu0 0.0
      %706 = vmatpush1.msra.mxu0 0.0
      %707 = vmatprep.subr.mxu0 0.0
      %708 = vmatpush1.msra.mxu0 0.0
      %709 = vmatprep.subr.mxu0 0.0
      %710 = vmatpush1.msra.mxu0 0.0
      %711 = vmatprep.subr.mxu0 0.0
      %712 = vmatpush1.msra.mxu0 0.0
      %713 = vmatprep.subr.mxu0 0.0
      %714 = vmatpush1.msra.mxu0 0.0
      %715 = vmatprep.subr.mxu0 0.0
      %716 = vmatpush1.msra.mxu0 0.0
      %717 = vmatprep.subr.mxu0 0.0
      %718 = vmatpush1.msra.mxu0 0.0
      %719 = vmatprep.subr.mxu0 0.0
      %720 = vmatpush1.msra.mxu0 0.0
      %721 = vmatprep.subr.mxu0 0.0
      %722 = vmatpush1.msra.mxu0 0.0
      %723 = vmatprep.mubr.f32.mxu0 0.0
      %724 = vmatmul.mubr.f32.gmra.mrb[0].mxu0 %v444
      %v725 = vpop.f32.mrb[0].mxu0
      %v726 = vadd.f32 %v440, %v725
      %v727 = vpop.f32.mrb[0].mxu0
      %728 = vdwg.mxu0
      %729 = vst [vmem:[%s170] sm:$0xff] %v513
      %730 = vst [vmem:[%s170 + $0x8] sm:$0xff] %v515
      %731 = vst [vmem:[%s170 + $0x10] sm:$0xff] %v584
      %732 = vst [vmem:[%s170 + $0x18] sm:$0xff] %v586
      %733 = vst [vmem:[%s170 + $0x20] sm:$0xff] %v655
      %734 = vst [vmem:[%s170 + $0x28] sm:$0xff] %v657
      %735 = vst [vmem:[%s170 + $0x30] sm:$0xff] %v726
      %p736 = scmp.lt.s32.totalorder %s14, 1
      %s737 = scalar_select %p736, %s14, 1
      %s738 = smul.addr %s737, 7
      %s739 = smul.addr %s738, 8
      %s740 = scalar_lea.vmem %s3, %s739
      // Predicated region
      $region33: #{dec_mnist_forward.7} parent=31 // pred_check
        %p741 = pneg %p100
      $region34: #{dec_mnist_forward.7} parent=31 // pred_check_branch
        %743 = sbr.rel (%p741) target = $region36
      $region35: #{dec_mnist_forward.7} parent=31 // pred_region
        _
      $region36: #{dec_mnist_forward.7} parent=31 // pred_fallthru
        _
    $region32: #{dec_mnist_forward.7} parent=5 // pred_fallthru
      _
    %p744 = scmp.le.s32.totalorder 2, %s9
    // Predicated region
    $region37: #{dec_mnist_forward.7} parent=5 // pred_check
      %p745 = pneg %p744
    $region38: #{dec_mnist_forward.7} parent=5 // pred_check_branch
      %747 = sbr.rel (%p745) target = $region40
    $region39: #{dec_mnist_forward.7} parent=5 // pred_region
      %s748 = ssub.s32 %s9, 2
      // Predicated region
      $region41: #{dec_mnist_forward.7} parent=39 // pred_check
        %p749 = pneg %p106
      $region42: #{dec_mnist_forward.7} parent=39 // pred_check_branch
        %751 = sbr.rel (%p749) target = $region44
      $region43: #{dec_mnist_forward.7} parent=39 // pred_region
        %p752 = scmp.lt.s32.totalorder %s15, 1
        %s753 = scalar_select %p752, %s15, 1
        %s754 = smul.addr %s753, 7
        %s755 = smul.addr %s754, 8
        %s756 = scalar_lea.vmem %s3, %s755
      $region44: #{dec_mnist_forward.7} parent=39 // pred_fallthru
        _
    $region40: #{dec_mnist_forward.7} parent=5 // pred_fallthru
      _
  $region6: #{dec_mnist_forward.7} parent=0 // loop_footer
    %s13 = sadd.s32 1, %s9
  $region7: #{dec_mnist_forward.7} parent=0 // loop_footer_branch
    %8 = sbr.rel target = $region3
  $region8: #{dec_mnist_forward.7} parent=0 // loop_exit
    _

</llo_original>
